<compile_context>
chip_gen: v7x
topology: tpu7x:2x2x1
jax: 0.10.0
libtpu: 0.0.40
codegen_flags: <defaults>
</compile_context>

<pallas_src>
import functools

import jax
import jax.numpy as jnp
from jax.experimental import pallas as pl
from jax.experimental.pallas import tpu as pltpu


# ----------------------------------------------------------------------------
# p4m group machinery (glue: tiny weight tensors, plain JAX)
# ----------------------------------------------------------------------------
# group element g = (m, r): spatial action T_g = Rot(90*r) o MirrorX^m
# index s = m*4 + r, s in [0, 8)
def _p4m_inv(m, r):
    return (m, (-r) % 4) if m == 0 else (m, r)


def _p4m_mul(g1, g2):
    m1, r1 = g1
    m2, r2 = g2
    return ((m1 + m2) % 2, (r1 + (r2 if m1 == 0 else -r2)) % 4)


def _spatial_transform(k, m, r):
    if m:
        k = jnp.flip(k, axis=-1)
    return jnp.rot90(k, r, axes=(-2, -1))


def expand_p4m_filter(w):
    """(Cout, Cin, 8, kh, kw) -> (Cout*8, Cin*8, kh, kw) expanded p4m filter bank."""
    # TODO(synk): exact GrouPy index/orientation convention may differ from this
    # (consistent) p4m convention by a fixed permutation of the group axis.
    cout, cin, g, kh, kw = w.shape
    assert g == 8
    banks = []
    for s in range(8):
        gelem = (s // 4, s % 4)
        ginv = _p4m_inv(*gelem)
        perm = []
        for t in range(8):
            h = (t // 4, t % 4)
            hp = _p4m_mul(ginv, h)
            perm.append(hp[0] * 4 + hp[1])
        wk = w[:, :, jnp.array(perm), :, :]          # permute input-group axis
        wk = _spatial_transform(wk, *gelem)          # transform spatial support
        banks.append(wk)
    wexp = jnp.stack(banks, axis=1)                  # (Cout, 8, Cin, 8, kh, kw)
    return wexp.reshape(cout * 8, cin * 8, kh, kw)


# ----------------------------------------------------------------------------
# Padding / tiling helpers
# ----------------------------------------------------------------------------
def _round_up(x, m):
    return (x + m - 1) // m * m


def _ceil_div(a, b):
    return -(-a // b)


def _choose_m_tiling(m, max_tm=512):
    """Balanced M tile: multiple of 16 (bf16 sublane packing), >=2 tiles when
    M allows (feeds both v7x TensorCores), and padding bounded to < one tile."""
    n_tiles = max(1, _ceil_div(m, max_tm))
    if n_tiles < 2 and m > 16:
        n_tiles = 2
    tm = _round_up(_ceil_div(m, n_tiles), 16)
    mp = _round_up(m, tm)
    return tm, mp


def _choose_tk(kp, max_tk):
    """kp is a multiple of 128; largest K tile <= max_tk that divides kp."""
    tk = min(kp, max_tk)
    while kp % tk:
        tk -= 128
    return tk


def _im2col_folded(x_nhwc, ksize, stride, padding):
    """NHWC -> (N*Ho*Wo, ksize*ksize*C) patch matrix with taps folded into K."""
    # TODO(synk): for large feature maps, do im2col inside the kernel (DMA an
    # NHWC row-band with halo and pl.ds-slice the taps) to avoid materializing
    # the 9x patch matrix in HBM; done XLA-side here in bf16.
    n, h, w, c = x_nhwc.shape
    xp = jnp.pad(x_nhwc, ((0, 0), (padding, padding), (padding, padding), (0, 0)))
    ho = (h + 2 * padding - ksize) // stride + 1
    wo = (w + 2 * padding - ksize) // stride + 1
    taps = []
    for kh in range(ksize):
        for kw in range(ksize):
            sl = xp[:, kh:kh + (ho - 1) * stride + 1:stride,
                    kw:kw + (wo - 1) * stride + 1:stride, :]
            taps.append(sl)
    pat = jnp.stack(taps, axis=3)                    # (N, Ho, Wo, k*k, C)
    return pat.reshape(n * ho * wo, ksize * ksize * c), ho, wo


# ----------------------------------------------------------------------------
# Pallas kernel: K-tiled matmul + fused BN affine (+residual) (+ReLU)
# ----------------------------------------------------------------------------
def _matmul_bn_kernel(*refs, tk, w_resident, apply_relu, has_residual):
    if has_residual:
        p_ref, w_ref, scale_ref, shift_ref, res_ref, o_ref, acc_ref = refs
    else:
        p_ref, w_ref, scale_ref, shift_ref, o_ref, acc_ref = refs
        res_ref = None
    kk = pl.program_id(1)

    @pl.when(kk == 0)
    def _():
        acc_ref[...] = jnp.zeros_like(acc_ref)

    if w_resident:
        # Weight matrix is VMEM-resident (fetched once); slice the K tile here.
        k0 = pl.multiple_of(kk * tk, 128)
        w_tile = w_ref[pl.ds(k0, tk), :]
    else:
        w_tile = w_ref[...]

    acc_ref[...] += jnp.dot(p_ref[...], w_tile,
                            preferred_element_type=jnp.float32)

    @pl.when(kk == pl.num_programs(1) - 1)
    def _():
        y = acc_ref[...] * scale_ref[...] + shift_ref[...]
        if res_ref is not None:
            y = y + res_ref[...].astype(jnp.float32)
        if apply_relu:
            y = jnp.maximum(y, 0.0)
        o_ref[...] = y.astype(o_ref.dtype)


_W_RESIDENT_BYTES = 12 * 1024 * 1024   # hold weights resident below this size


def _matmul_bn_pallas(patches, wmat, scale, shift, residual, apply_relu, *, tm):
    """patches: (Mp, Kp) bf16; wmat: (Kp, Ncp) bf16; scale/shift: (1, Ncp) f32;
    residual: (Mp, Ncp) bf16 or None -> (Mp, Ncp) bf16."""
    mp, kp = patches.shape
    ncp = wmat.shape[-1]
    max_tk = 1024 if ncp >= 2048 else 2048
    tk = _choose_tk(kp, max_tk)
    grid = (mp // tm, kp // tk)

    w_resident = kp * ncp * 2 <= _W_RESIDENT_BYTES
    if w_resident:
        # Constant index_map => fetched once, never re-streamed per M tile.
        w_spec = pl.BlockSpec((kp, ncp), lambda i, k: (0, 0))
    else:
        w_spec = pl.BlockSpec((tk, ncp), lambda i, k: (k, 0))

    in_specs = [
        pl.BlockSpec((tm, tk), lambda i, k: (i, k)),
        w_spec,
        pl.BlockSpec((1, ncp), lambda i, k: (0, 0)),
        pl.BlockSpec((1, ncp), lambda i, k: (0, 0)),
    ]
    args = [patches, wmat, scale, shift]
    has_res = residual is not None
    if has_res:
        in_specs.append(pl.BlockSpec((tm, ncp), lambda i, k: (i, 0)))
        args.append(residual.astype(jnp.bfloat16))

    kernel = functools.partial(
        _matmul_bn_kernel, tk=tk, w_resident=w_resident,
        apply_relu=apply_relu, has_residual=has_res)

    bytes_accessed = (mp * kp + kp * ncp + mp * ncp * (2 if has_res else 1)) * 2 \
        + 2 * ncp * 4
    cost = pl.CostEstimate(flops=2 * mp * kp * ncp, transcendentals=0,
                           bytes_accessed=bytes_accessed)

    return pl.pallas_call(
        kernel,
        out_shape=jax.ShapeDtypeStruct((mp, ncp), jnp.bfloat16),
        grid_spec=pltpu.PrefetchScalarGridSpec(
            num_scalar_prefetch=0,
            grid=grid,
            in_specs=in_specs,
            out_specs=pl.BlockSpec((tm, ncp), lambda i, k: (i, 0)),
            scratch_shapes=[pltpu.VMEM((tm, ncp), jnp.float32)],
        ),
        compiler_params=pltpu.CompilerParams(
            dimension_semantics=("parallel", "arbitrary"),
            vmem_limit_bytes=32 * 1024 * 1024),
        cost_estimate=cost,
    )(*args)


# ----------------------------------------------------------------------------
# P4M conv + BN (+ReLU / +residual) building block
# ----------------------------------------------------------------------------
def p4m_conv_bn(x_nhwc, w, bn_scale, bn_shift, *, stride, padding, relu,
                residual=None, m_tiling=None):
    """x_nhwc: (N, H, W, Cin*8);  w: (Cout, Cin, 8, k, k).

    Returns padded patch-matrix output (Mp, Ncp) bf16 plus (ho, wo)."""
    n, h, wd, cin8 = x_nhwc.shape
    cout, cin, g, ks, _ = w.shape
    assert cin8 == cin * 8 and g == 8
    nc = cout * 8

    # expanded filter, taps folded into the contraction dim, row = tap*Cin8 + c8
    wexp = expand_p4m_filter(w)                                  # (Cout*8, Cin*8, k, k)
    wmat = wexp.transpose(2, 3, 1, 0).reshape(ks * ks * cin8, nc)

    # cast to bf16 BEFORE im2col so the 9x patch matrix is built/padded in bf16
    xb = x_nhwc.astype(jnp.bfloat16)
    patches, ho, wo = _im2col_folded(xb, ks, stride, padding)    # (M, k*k*Cin*8) bf16
    m = n * ho * wo
    k = ks * ks * cin8

    kp = _round_up(k, 128)
    ncp = _round_up(nc, 128)
    if m_tiling is None:
        tm, mp = _choose_m_tiling(m, max_tm=(256 if ncp >= 2048 else 512))
    else:
        tm, mp = m_tiling
    assert mp % tm == 0 and mp >= m

    patches = jnp.pad(patches, ((0, mp - m), (0, kp - k)))       # stays bf16
    wmat = jnp.pad(wmat, ((0, kp - k), (0, ncp - nc))).astype(jnp.bfloat16)

    scale_cols = jnp.pad(jnp.repeat(bn_scale, 8).astype(jnp.float32),
                         (0, ncp - nc))[None, :]
    shift_cols = jnp.pad(jnp.repeat(bn_shift, 8).astype(jnp.float32),
                         (0, ncp - nc))[None, :]

    out = _matmul_bn_pallas(patches, wmat, scale_cols, shift_cols, residual,
                            relu, tm=tm)
    return out, ho, wo


# ----------------------------------------------------------------------------
# BasicBlock forward
# ----------------------------------------------------------------------------
def basic_block_forward(x5, params, *, stride):
    n, cin, g, h, wd = x5.shape
    planes = params["w1"].shape[0]
    nc = planes * 8

    x_nhwc = (x5.reshape(n, cin * 8, h, wd).transpose(0, 2, 3, 1)
              .astype(jnp.bfloat16))                              # (N,H,W,Cin*8)

    # output geometry (shared by conv1 / shortcut / conv2) and a SINGLE M tiling
    ho = (h + 2 - 3) // stride + 1
    wo = (wd + 2 - 3) // stride + 1
    m = n * ho * wo
    ncp = _round_up(nc, 128)
    tm, mp = _choose_m_tiling(m, max_tm=(256 if ncp >= 2048 else 512))
    m_tiling = (tm, mp)

    # conv1 -> bn1 -> relu  (bf16 output, consumed directly by conv2's im2col)
    h_pad, ho1, wo1 = p4m_conv_bn(
        x_nhwc, params["w1"], params["bn1_scale"], params["bn1_shift"],
        stride=stride, padding=1, relu=True, m_tiling=m_tiling)
    assert (ho1, wo1) == (ho, wo)
    h_nhwc = h_pad[:m, :nc].reshape(n, ho, wo, nc)                # col = c*8 + g

    # shortcut, produced in the same padded (Mp, Ncp) bf16 matrix layout
    if stride != 1 or cin != planes:
        sc_pad, _, _ = p4m_conv_bn(
            x_nhwc, params["w_sc"], params["bnsc_scale"], params["bnsc_shift"],
            stride=stride, padding=0, relu=False, m_tiling=m_tiling)
    else:
        sc_pad = x_nhwc.reshape(m, cin * 8)                       # already bf16
        if mp != m or ncp != nc:
            sc_pad = jnp.pad(sc_pad, ((0, mp - m), (0, ncp - nc)))

    # conv2 -> bn2 -> (+shortcut) -> relu, all fused in one kernel epilogue
    y_pad, _, _ = p4m_conv_bn(
        h_nhwc, params["w2"], params["bn2_scale"], params["bn2_shift"],
        stride=1, padding=1, relu=True, residual=sc_pad, m_tiling=m_tiling)

    out = y_pad[:m, :nc].reshape(n, ho, wo, planes, 8).transpose(0, 3, 4, 1, 2)
    return out.astype(jnp.float32)


# ----------------------------------------------------------------------------
# Pure-JAX reference (f32) for a sanity check
# ----------------------------------------------------------------------------
def _ref_conv_bn(x_nhwc, w, scale, shift, stride, padding, relu):
    wexp = expand_p4m_filter(w)                                    # (O, I, kh, kw)
    y = jax.lax.conv_general_dilated(
        x_nhwc, wexp.transpose(2, 3, 1, 0),
        window_strides=(stride, stride),
        padding=((padding, padding), (padding, padding)),
        dimension_numbers=("NHWC", "HWIO", "NHWC"))
    y = y * jnp.repeat(scale, 8) + jnp.repeat(shift, 8)
    return jnp.maximum(y, 0.0) if relu else y


def _ref_block(x5, params, stride):
    n, cin, g, h, w = x5.shape
    planes = params["w1"].shape[0]
    x_nhwc = x5.reshape(n, cin * 8, h, w).transpose(0, 2, 3, 1)
    h1 = _ref_conv_bn(x_nhwc, params["w1"], params["bn1_scale"],
                      params["bn1_shift"], stride, 1, True)
    y = _ref_conv_bn(h1, params["w2"], params["bn2_scale"],
                     params["bn2_shift"], 1, 1, False)
    if stride != 1 or cin != planes:
        sc = _ref_conv_bn(x_nhwc, params["w_sc"], params["bnsc_scale"],
                          params["bnsc_shift"], stride, 0, False)
    else:
        sc = x_nhwc
    out = jnp.maximum(y + sc, 0.0)
    n2, ho, wo, _ = out.shape
    return out.reshape(n2, ho, wo, planes, 8).transpose(0, 3, 4, 1, 2)


# ----------------------------------------------------------------------------
# Deterministic parameter construction
# ----------------------------------------------------------------------------
def _fold_bn(gamma, beta, mean, var, eps=1e-5):
    scale = gamma / jnp.sqrt(var + eps)
    shift = beta - mean * scale
    return scale, shift


def make_params(key, in_planes, planes, stride):
    ks = jax.random.split(key, 8)
    params = {
        "w1": 0.1 * jax.random.normal(ks[0], (planes, in_planes, 8, 3, 3), jnp.float32),
        "w2": 0.1 * jax.random.normal(ks[1], (planes, planes, 8, 3, 3), jnp.float32),
    }
    g1 = 1.0 + 0.1 * jax.random.normal(ks[2], (planes,), jnp.float32)
    b1 = 0.1 * jax.random.normal(ks[3], (planes,), jnp.float32)
    m1 = 0.05 * jax.random.normal(ks[4], (planes,), jnp.float32)
    v1 = jnp.abs(1.0 + 0.1 * jax.random.normal(ks[5], (planes,), jnp.float32))
    params["bn1_scale"], params["bn1_shift"] = _fold_bn(g1, b1, m1, v1)
    params["bn2_scale"], params["bn2_shift"] = _fold_bn(
        1.0 + 0.05 * g1, 0.5 * b1, -m1, v1 + 0.1)
    if stride != 1 or in_planes != planes:
        params["w_sc"] = 0.1 * jax.random.normal(
            ks[6], (planes, in_planes, 8, 1, 1), jnp.float32)
        gsc = 1.0 - 0.05 * g1
        params["bnsc_scale"], params["bnsc_shift"] = _fold_bn(
            gsc, 0.2 * b1, 0.5 * m1, v1 + 0.2)
    return params


if __name__ == "__main__":
    key = jax.random.PRNGKey(0)
    kx, kp = jax.random.split(key)

    in_planes, planes, stride = 4, 8, 2
    N, H, W = 2, 8, 8
    # x layout: (N, C_in, 8, H, W) — p4m feature maps, matching P4MConvP4M input.
    x = jax.random.normal(kx, (N, in_planes, 8, H, W), jnp.float32)
    params = make_params(kp, in_planes, planes, stride)

    fwd = jax.jit(functools.partial(basic_block_forward, stride=stride))
    out = fwd(x, params)
    out = jax.block_until_ready(out)

    expected = (N, planes, 8, (H + 2 - 3) // stride + 1, (W + 2 - 3) // stride + 1)
    assert out.shape == expected, (out.shape, expected)
    assert bool(jnp.all(jnp.isfinite(out)))

    # numeric check vs plain-JAX reference (bf16 matmul / bf16 storage tolerance)
    ref = jax.jit(functools.partial(_ref_block, stride=stride))(x, params)
    ref = jax.block_until_ready(ref)
    assert bool(jnp.allclose(out, ref, rtol=5e-2, atol=2.5e-1)), float(
        jnp.max(jnp.abs(out - ref)))

    print("KERNEL_OK")
</pallas_src>

<mosaic_0001>
module attributes {stable_mosaic.version = 11 : i64} {
  func.func @_matmul_bn_kernel(%arg0: i32, %arg1: i32, %arg2: memref<16x384xbf16, #tpu.memory_space<vmem>>, %arg3: memref<384x128xbf16, #tpu.memory_space<vmem>>, %arg4: memref<1x128xf32, #tpu.memory_space<vmem>>, %arg5: memref<1x128xf32, #tpu.memory_space<vmem>>, %arg6: memref<16x128xbf16, #tpu.memory_space<vmem>>, %arg7: memref<16x128xf32, #tpu.memory_space<vmem>>) attributes {dimension_semantics = [#tpu.dimension_semantics<parallel>, #tpu.dimension_semantics<arbitrary>], iteration_bounds = array<i64: 2, 1>, scalar_prefetch = 0 : i64, scratch_operands = 1 : i64, tpu.core_type = #tpu.core_type<tc>, window_params = [{transform_indices = @transform_0, window_bounds = array<i64: 16, 384>}, {pipeline_mode = #tpu.pipeline_mode<synchronous>, transform_indices = @transform_1, window_bounds = array<i64: 384, 128>}, {pipeline_mode = #tpu.pipeline_mode<synchronous>, transform_indices = @transform_2, window_bounds = array<i64: 1, 128>}, {pipeline_mode = #tpu.pipeline_mode<synchronous>, transform_indices = @transform_3, window_bounds = array<i64: 1, 128>}, {transform_indices = @transform_4, window_bounds = array<i64: 16, 128>}]} {
    %c0_i32 = arith.constant 0 : i32
    %0 = arith.cmpi eq, %arg1, %c0_i32 : i32
    %1 = arith.extui %0 : i1 to i32
    %c0_i32_0 = arith.constant 0 : i32
    %2 = arith.cmpi ne, %1, %c0_i32_0 : i32
    scf.if %2 {
      %cst_9 = arith.constant 0.000000e+00 : f32
      %15 = vector.broadcast %cst_9 : f32 to vector<16x128xf32>
      %c0_10 = arith.constant 0 : index
      %c0_11 = arith.constant 0 : index
      %16 = vector.load %arg7[%c0_10, %c0_11] : memref<16x128xf32, #tpu.memory_space<vmem>>, vector<16x128xf32>
      tpu.vector_store %arg7[%c0_10, %c0_11], %15 {strides = array<i32>} : memref<16x128xf32, #tpu.memory_space<vmem>>, vector<16x128xf32>,
    } else {
    }
    %c384_i32 = arith.constant 384 : i32
    %3 = arith.muli %arg1, %c384_i32 : i32
    %4 = tpu.assume_multiple %3, 128 : i32
    %5 = arith.index_cast %4 : i32 to index
    %c0 = arith.constant 0 : index
    %6 = vector.load %arg3[%5, %c0] : memref<384x128xbf16, #tpu.memory_space<vmem>>, vector<384x128xbf16>
    %c0_1 = arith.constant 0 : index
    %c0_2 = arith.constant 0 : index
    %7 = vector.load %arg7[%c0_1, %c0_2] : memref<16x128xf32, #tpu.memory_space<vmem>>, vector<16x128xf32>
    %c0_3 = arith.constant 0 : index
    %c0_4 = arith.constant 0 : index
    %8 = vector.load %arg2[%c0_3, %c0_4] : memref<16x384xbf16, #tpu.memory_space<vmem>>, vector<16x384xbf16>
    %cst = arith.constant dense<0.000000e+00> : vector<16x128xf32>
    %9 = tpu.matmul %8, %6, %cst {dimension_numbers = #tpu.dot_dimension_numbers<[1], [0], [0], [1], [0, 0, 1, 1], [], []>} : vector<16x384xbf16>, vector<384x128xbf16>, vector<16x128xf32> -> vector<16x128xf32>
    %10 = arith.addf %7, %9 : vector<16x128xf32>
    %c0_5 = arith.constant 0 : index
    %c0_6 = arith.constant 0 : index
    %11 = vector.load %arg7[%c0_5, %c0_6] : memref<16x128xf32, #tpu.memory_space<vmem>>, vector<16x128xf32>
    tpu.vector_store %arg7[%c0_5, %c0_6], %10 {strides = array<i32>} : memref<16x128xf32, #tpu.memory_space<vmem>>, vector<16x128xf32>,
    %c0_i32_7 = arith.constant 0 : i32
    %12 = arith.cmpi eq, %arg1, %c0_i32_7 : i32
    %13 = arith.extui %12 : i1 to i32
    %c0_i32_8 = arith.constant 0 : i32
    %14 = arith.cmpi ne, %13, %c0_i32_8 : i32
    scf.if %14 {
      %c0_9 = arith.constant 0 : index
      %c0_10 = arith.constant 0 : index
      %15 = vector.load %arg7[%c0_9, %c0_10] : memref<16x128xf32, #tpu.memory_space<vmem>>, vector<16x128xf32>
      %c0_11 = arith.constant 0 : index
      %c0_12 = arith.constant 0 : index
      %16 = vector.load %arg4[%c0_11, %c0_12] : memref<1x128xf32, #tpu.memory_space<vmem>>, vector<1x128xf32>
      %17 = vector.broadcast %16 : vector<1x128xf32> to vector<16x128xf32>
      %18 = arith.mulf %15, %17 : vector<16x128xf32>
      %c0_13 = arith.constant 0 : index
      %c0_14 = arith.constant 0 : index
      %19 = vector.load %arg5[%c0_13, %c0_14] : memref<1x128xf32, #tpu.memory_space<vmem>>, vector<1x128xf32>
      %20 = vector.broadcast %19 : vector<1x128xf32> to vector<16x128xf32>
      %21 = arith.addf %18, %20 : vector<16x128xf32>
      %cst_15 = arith.constant 0.000000e+00 : f32
      %22 = vector.broadcast %cst_15 : f32 to vector<16x128xf32>
      %23 = arith.maximumf %21, %22 : vector<16x128xf32>
      %24 = arith.truncf %23 : vector<16x128xf32> to vector<16x128xbf16>
      %c0_16 = arith.constant 0 : index
      %c0_17 = arith.constant 0 : index
      %25 = vector.load %arg6[%c0_16, %c0_17] : memref<16x128xbf16, #tpu.memory_space<vmem>>, vector<16x128xbf16>
      tpu.vector_store %arg6[%c0_16, %c0_17], %24 {strides = array<i32>} : memref<16x128xbf16, #tpu.memory_space<vmem>>, vector<16x128xbf16>,
    } else {
    }
    return
  }
  func.func @transform_0(%arg0: i32, %arg1: i32) -> (i32, i32) {
    %c0_i32 = arith.constant 0 : i32
    return %arg0, %arg1 : i32, i32
  }
  func.func @transform_1(%arg0: i32, %arg1: i32) -> (i32, i32) {
    %c0_i32 = arith.constant 0 : i32
    %c0_i32_0 = arith.constant 0 : i32
    %c0_i32_1 = arith.constant 0 : i32
    return %c0_i32, %c0_i32_0 : i32, i32
  }
  func.func @transform_2(%arg0: i32, %arg1: i32) -> (i32, i32) {
    %c0_i32 = arith.constant 0 : i32
    %c0_i32_0 = arith.constant 0 : i32
    %c0_i32_1 = arith.constant 0 : i32
    return %c0_i32, %c0_i32_0 : i32, i32
  }
  func.func @transform_3(%arg0: i32, %arg1: i32) -> (i32, i32) {
    %c0_i32 = arith.constant 0 : i32
    %c0_i32_0 = arith.constant 0 : i32
    %c0_i32_1 = arith.constant 0 : i32
    return %c0_i32, %c0_i32_0 : i32, i32
  }
  func.func @transform_4(%arg0: i32, %arg1: i32) -> (i32, i32) {
    %c0_i32 = arith.constant 0 : i32
    %c0_i32_0 = arith.constant 0 : i32
    return %arg0, %c0_i32 : i32, i32
  }
}

module attributes {stable_mosaic.version = 11 : i64} {
  func.func @_matmul_bn_kernel(%arg0: i32, %arg1: i32, %arg2: memref<16x128xbf16, #tpu.memory_space<vmem>>, %arg3: memref<128x128xbf16, #tpu.memory_space<vmem>>, %arg4: memref<1x128xf32, #tpu.memory_space<vmem>>, %arg5: memref<1x128xf32, #tpu.memory_space<vmem>>, %arg6: memref<16x128xbf16, #tpu.memory_space<vmem>>, %arg7: memref<16x128xf32, #tpu.memory_space<vmem>>) attributes {dimension_semantics = [#tpu.dimension_semantics<parallel>, #tpu.dimension_semantics<arbitrary>], iteration_bounds = array<i64: 2, 1>, scalar_prefetch = 0 : i64, scratch_operands = 1 : i64, tpu.core_type = #tpu.core_type<tc>, window_params = [{transform_indices = @transform_0, window_bounds = array<i64: 16, 128>}, {pipeline_mode = #tpu.pipeline_mode<synchronous>, transform_indices = @transform_1, window_bounds = array<i64: 128, 128>}, {pipeline_mode = #tpu.pipeline_mode<synchronous>, transform_indices = @transform_2, window_bounds = array<i64: 1, 128>}, {pipeline_mode = #tpu.pipeline_mode<synchronous>, transform_indices = @transform_3, window_bounds = array<i64: 1, 128>}, {transform_indices = @transform_4, window_bounds = array<i64: 16, 128>}]} {
    %c0_i32 = arith.constant 0 : i32
    %0 = arith.cmpi eq, %arg1, %c0_i32 : i32
    %1 = arith.extui %0 : i1 to i32
    %c0_i32_0 = arith.constant 0 : i32
    %2 = arith.cmpi ne, %1, %c0_i32_0 : i32
    scf.if %2 {
      %cst_9 = arith.constant 0.000000e+00 : f32
      %15 = vector.broadcast %cst_9 : f32 to vector<16x128xf32>
      %c0_10 = arith.constant 0 : index
      %c0_11 = arith.constant 0 : index
      %16 = vector.load %arg7[%c0_10, %c0_11] : memref<16x128xf32, #tpu.memory_space<vmem>>, vector<16x128xf32>
      tpu.vector_store %arg7[%c0_10, %c0_11], %15 {strides = array<i32>} : memref<16x128xf32, #tpu.memory_space<vmem>>, vector<16x128xf32>,
    } else {
    }
    %c128_i32 = arith.constant 128 : i32
    %3 = arith.muli %arg1, %c128_i32 : i32
    %4 = tpu.assume_multiple %3, 128 : i32
    %5 = arith.index_cast %4 : i32 to index
    %c0 = arith.constant 0 : index
    %6 = vector.load %arg3[%5, %c0] : memref<128x128xbf16, #tpu.memory_space<vmem>>, vector<128x128xbf16>
    %c0_1 = arith.constant 0 : index
    %c0_2 = arith.constant 0 : index
    %7 = vector.load %arg7[%c0_1, %c0_2] : memref<16x128xf32, #tpu.memory_space<vmem>>, vector<16x128xf32>
    %c0_3 = arith.constant 0 : index
    %c0_4 = arith.constant 0 : index
    %8 = vector.load %arg2[%c0_3, %c0_4] : memref<16x128xbf16, #tpu.memory_space<vmem>>, vector<16x128xbf16>
    %cst = arith.constant dense<0.000000e+00> : vector<16x128xf32>
    %9 = tpu.matmul %8, %6, %cst {dimension_numbers = #tpu.dot_dimension_numbers<[1], [0], [0], [1], [0, 0, 1, 1], [], []>} : vector<16x128xbf16>, vector<128x128xbf16>, vector<16x128xf32> -> vector<16x128xf32>
    %10 = arith.addf %7, %9 : vector<16x128xf32>
    %c0_5 = arith.constant 0 : index
    %c0_6 = arith.constant 0 : index
    %11 = vector.load %arg7[%c0_5, %c0_6] : memref<16x128xf32, #tpu.memory_space<vmem>>, vector<16x128xf32>
    tpu.vector_store %arg7[%c0_5, %c0_6], %10 {strides = array<i32>} : memref<16x128xf32, #tpu.memory_space<vmem>>, vector<16x128xf32>,
    %c0_i32_7 = arith.constant 0 : i32
    %12 = arith.cmpi eq, %arg1, %c0_i32_7 : i32
    %13 = arith.extui %12 : i1 to i32
    %c0_i32_8 = arith.constant 0 : i32
    %14 = arith.cmpi ne, %13, %c0_i32_8 : i32
    scf.if %14 {
      %c0_9 = arith.constant 0 : index
      %c0_10 = arith.constant 0 : index
      %15 = vector.load %arg7[%c0_9, %c0_10] : memref<16x128xf32, #tpu.memory_space<vmem>>, vector<16x128xf32>
      %c0_11 = arith.constant 0 : index
      %c0_12 = arith.constant 0 : index
      %16 = vector.load %arg4[%c0_11, %c0_12] : memref<1x128xf32, #tpu.memory_space<vmem>>, vector<1x128xf32>
      %17 = vector.broadcast %16 : vector<1x128xf32> to vector<16x128xf32>
      %18 = arith.mulf %15, %17 : vector<16x128xf32>
      %c0_13 = arith.constant 0 : index
      %c0_14 = arith.constant 0 : index
      %19 = vector.load %arg5[%c0_13, %c0_14] : memref<1x128xf32, #tpu.memory_space<vmem>>, vector<1x128xf32>
      %20 = vector.broadcast %19 : vector<1x128xf32> to vector<16x128xf32>
      %21 = arith.addf %18, %20 : vector<16x128xf32>
      %22 = arith.truncf %21 : vector<16x128xf32> to vector<16x128xbf16>
      %c0_15 = arith.constant 0 : index
      %c0_16 = arith.constant 0 : index
      %23 = vector.load %arg6[%c0_15, %c0_16] : memref<16x128xbf16, #tpu.memory_space<vmem>>, vector<16x128xbf16>
      tpu.vector_store %arg6[%c0_15, %c0_16], %22 {strides = array<i32>} : memref<16x128xbf16, #tpu.memory_space<vmem>>, vector<16x128xbf16>,
    } else {
    }
    return
  }
  func.func @transform_0(%arg0: i32, %arg1: i32) -> (i32, i32) {
    %c0_i32 = arith.constant 0 : i32
    return %arg0, %arg1 : i32, i32
  }
  func.func @transform_1(%arg0: i32, %arg1: i32) -> (i32, i32) {
    %c0_i32 = arith.constant 0 : i32
    %c0_i32_0 = arith.constant 0 : i32
    %c0_i32_1 = arith.constant 0 : i32
    return %c0_i32, %c0_i32_0 : i32, i32
  }
  func.func @transform_2(%arg0: i32, %arg1: i32) -> (i32, i32) {
    %c0_i32 = arith.constant 0 : i32
    %c0_i32_0 = arith.constant 0 : i32
    %c0_i32_1 = arith.constant 0 : i32
    return %c0_i32, %c0_i32_0 : i32, i32
  }
  func.func @transform_3(%arg0: i32, %arg1: i32) -> (i32, i32) {
    %c0_i32 = arith.constant 0 : i32
    %c0_i32_0 = arith.constant 0 : i32
    %c0_i32_1 = arith.constant 0 : i32
    return %c0_i32, %c0_i32_0 : i32, i32
  }
  func.func @transform_4(%arg0: i32, %arg1: i32) -> (i32, i32) {
    %c0_i32 = arith.constant 0 : i32
    %c0_i32_0 = arith.constant 0 : i32
    return %arg0, %c0_i32 : i32, i32
  }
}

module attributes {stable_mosaic.version = 11 : i64} {
  func.func @_matmul_bn_kernel(%arg0: i32, %arg1: i32, %arg2: memref<16x640xbf16, #tpu.memory_space<vmem>>, %arg3: memref<640x128xbf16, #tpu.memory_space<vmem>>, %arg4: memref<1x128xf32, #tpu.memory_space<vmem>>, %arg5: memref<1x128xf32, #tpu.memory_space<vmem>>, %arg6: memref<16x128xbf16, #tpu.memory_space<vmem>>, %arg7: memref<16x128xbf16, #tpu.memory_space<vmem>>, %arg8: memref<16x128xf32, #tpu.memory_space<vmem>>) attributes {dimension_semantics = [#tpu.dimension_semantics<parallel>, #tpu.dimension_semantics<arbitrary>], iteration_bounds = array<i64: 2, 1>, scalar_prefetch = 0 : i64, scratch_operands = 1 : i64, tpu.core_type = #tpu.core_type<tc>, window_params = [{transform_indices = @transform_0, window_bounds = array<i64: 16, 640>}, {pipeline_mode = #tpu.pipeline_mode<synchronous>, transform_indices = @transform_1, window_bounds = array<i64: 640, 128>}, {pipeline_mode = #tpu.pipeline_mode<synchronous>, transform_indices = @transform_2, window_bounds = array<i64: 1, 128>}, {pipeline_mode = #tpu.pipeline_mode<synchronous>, transform_indices = @transform_3, window_bounds = array<i64: 1, 128>}, {transform_indices = @transform_4, window_bounds = array<i64: 16, 128>}, {transform_indices = @transform_5, window_bounds = array<i64: 16, 128>}]} {
    %c0_i32 = arith.constant 0 : i32
    %0 = arith.cmpi eq, %arg1, %c0_i32 : i32
    %1 = arith.extui %0 : i1 to i32
    %c0_i32_0 = arith.constant 0 : i32
    %2 = arith.cmpi ne, %1, %c0_i32_0 : i32
    scf.if %2 {
      %cst_9 = arith.constant 0.000000e+00 : f32
      %15 = vector.broadcast %cst_9 : f32 to vector<16x128xf32>
      %c0_10 = arith.constant 0 : index
      %c0_11 = arith.constant 0 : index
      %16 = vector.load %arg8[%c0_10, %c0_11] : memref<16x128xf32, #tpu.memory_space<vmem>>, vector<16x128xf32>
      tpu.vector_store %arg8[%c0_10, %c0_11], %15 {strides = array<i32>} : memref<16x128xf32, #tpu.memory_space<vmem>>, vector<16x128xf32>,
    } else {
    }
    %c640_i32 = arith.constant 640 : i32
    %3 = arith.muli %arg1, %c640_i32 : i32
    %4 = tpu.assume_multiple %3, 128 : i32
    %5 = arith.index_cast %4 : i32 to index
    %c0 = arith.constant 0 : index
    %6 = vector.load %arg3[%5, %c0] : memref<640x128xbf16, #tpu.memory_space<vmem>>, vector<640x128xbf16>
    %c0_1 = arith.constant 0 : index
    %c0_2 = arith.constant 0 : index
    %7 = vector.load %arg8[%c0_1, %c0_2] : memref<16x128xf32, #tpu.memory_space<vmem>>, vector<16x128xf32>
    %c0_3 = arith.constant 0 : index
    %c0_4 = arith.constant 0 : index
    %8 = vector.load %arg2[%c0_3, %c0_4] : memref<16x640xbf16, #tpu.memory_space<vmem>>, vector<16x640xbf16>
    %cst = arith.constant dense<0.000000e+00> : vector<16x128xf32>
    %9 = tpu.matmul %8, %6, %cst {dimension_numbers = #tpu.dot_dimension_numbers<[1], [0], [0], [1], [0, 0, 1, 1], [], []>} : vector<16x640xbf16>, vector<640x128xbf16>, vector<16x128xf32> -> vector<16x128xf32>
    %10 = arith.addf %7, %9 : vector<16x128xf32>
    %c0_5 = arith.constant 0 : index
    %c0_6 = arith.constant 0 : index
    %11 = vector.load %arg8[%c0_5, %c0_6] : memref<16x128xf32, #tpu.memory_space<vmem>>, vector<16x128xf32>
    tpu.vector_store %arg8[%c0_5, %c0_6], %10 {strides = array<i32>} : memref<16x128xf32, #tpu.memory_space<vmem>>, vector<16x128xf32>,
    %c0_i32_7 = arith.constant 0 : i32
    %12 = arith.cmpi eq, %arg1, %c0_i32_7 : i32
    %13 = arith.extui %12 : i1 to i32
    %c0_i32_8 = arith.constant 0 : i32
    %14 = arith.cmpi ne, %13, %c0_i32_8 : i32
    scf.if %14 {
      %c0_9 = arith.constant 0 : index
      %c0_10 = arith.constant 0 : index
      %15 = vector.load %arg8[%c0_9, %c0_10] : memref<16x128xf32, #tpu.memory_space<vmem>>, vector<16x128xf32>
      %c0_11 = arith.constant 0 : index
      %c0_12 = arith.constant 0 : index
      %16 = vector.load %arg4[%c0_11, %c0_12] : memref<1x128xf32, #tpu.memory_space<vmem>>, vector<1x128xf32>
      %17 = vector.broadcast %16 : vector<1x128xf32> to vector<16x128xf32>
      %18 = arith.mulf %15, %17 : vector<16x128xf32>
      %c0_13 = arith.constant 0 : index
      %c0_14 = arith.constant 0 : index
      %19 = vector.load %arg5[%c0_13, %c0_14] : memref<1x128xf32, #tpu.memory_space<vmem>>, vector<1x128xf32>
      %20 = vector.broadcast %19 : vector<1x128xf32> to vector<16x128xf32>
      %21 = arith.addf %18, %20 : vector<16x128xf32>
      %c0_15 = arith.constant 0 : index
      %c0_16 = arith.constant 0 : index
      %22 = vector.load %arg6[%c0_15, %c0_16] : memref<16x128xbf16, #tpu.memory_space<vmem>>, vector<16x128xbf16>
      %23 = arith.extf %22 : vector<16x128xbf16> to vector<16x128xf32>
      %24 = arith.addf %21, %23 : vector<16x128xf32>
      %cst_17 = arith.constant 0.000000e+00 : f32
      %25 = vector.broadcast %cst_17 : f32 to vector<16x128xf32>
      %26 = arith.maximumf %24, %25 : vector<16x128xf32>
      %27 = arith.truncf %26 : vector<16x128xf32> to vector<16x128xbf16>
      %c0_18 = arith.constant 0 : index
      %c0_19 = arith.constant 0 : index
      %28 = vector.load %arg7[%c0_18, %c0_19] : memref<16x128xbf16, #tpu.memory_space<vmem>>, vector<16x128xbf16>
      tpu.vector_store %arg7[%c0_18, %c0_19], %27 {strides = array<i32>} : memref<16x128xbf16, #tpu.memory_space<vmem>>, vector<16x128xbf16>,
    } else {
    }
    return
  }
  func.func @transform_0(%arg0: i32, %arg1: i32) -> (i32, i32) {
    %c0_i32 = arith.constant 0 : i32
    return %arg0, %arg1 : i32, i32
  }
  func.func @transform_1(%arg0: i32, %arg1: i32) -> (i32, i32) {
    %c0_i32 = arith.constant 0 : i32
    %c0_i32_0 = arith.constant 0 : i32
    %c0_i32_1 = arith.constant 0 : i32
    return %c0_i32, %c0_i32_0 : i32, i32
  }
  func.func @transform_2(%arg0: i32, %arg1: i32) -> (i32, i32) {
    %c0_i32 = arith.constant 0 : i32
    %c0_i32_0 = arith.constant 0 : i32
    %c0_i32_1 = arith.constant 0 : i32
    return %c0_i32, %c0_i32_0 : i32, i32
  }
  func.func @transform_3(%arg0: i32, %arg1: i32) -> (i32, i32) {
    %c0_i32 = arith.constant 0 : i32
    %c0_i32_0 = arith.constant 0 : i32
    %c0_i32_1 = arith.constant 0 : i32
    return %c0_i32, %c0_i32_0 : i32, i32
  }
  func.func @transform_4(%arg0: i32, %arg1: i32) -> (i32, i32) {
    %c0_i32 = arith.constant 0 : i32
    %c0_i32_0 = arith.constant 0 : i32
    return %arg0, %c0_i32 : i32, i32
  }
  func.func @transform_5(%arg0: i32, %arg1: i32) -> (i32, i32) {
    %c0_i32 = arith.constant 0 : i32
    %c0_i32_0 = arith.constant 0 : i32
    return %arg0, %c0_i32 : i32, i32
  }
}

</mosaic_0001>

<llo_original>
// kernel: basic_block_forward.3
$region0: #{basic_block_forward.3}
  #allocation0 [shape = 'u32[]', space=smem, size = 0x4, offset = 0x4, fixed_abs, tag = 'smem constant byte address 0x4 - core index']
  #allocation1 [shape = 'u32[144,128]{1,0:T(1,128)}', space=vmem, size = 0x12000, scoped, tag = 'internal scratch']
  #allocation2 [shape = 'f32[16,128]{1,0:T(8,128)}', space=vmem, size = 0x2000, scoped, tag = 'scratch operand']
  %s0 = inlined_call_operand.vmem [shape: bf16[32,384], index: 0, kind: input, shape index: {}]
  %s1 = inlined_call_operand.vmem [shape: bf16[384,128], index: 1, kind: input, shape index: {}]
  %s2 = inlined_call_operand.vmem [shape: f32[1,128], index: 2, kind: input, shape index: {}]
  %s3 = inlined_call_operand.vmem [shape: f32[1,128], index: 3, kind: input, shape index: {}]
  %s4 = inlined_call_operand.vmem [shape: bf16[32,128], index: 4, kind: output, shape index: {}]
  %s5 = sld [smem:[#allocation0]]
  $region57: #{basic_block_forward.3} parent=0
    _
  %s7 = ssub.s32 1, %s5
  %s8 = scalar_select 0, %s7, %s5
  loop: start=0, step=1, limit=4
  $region2: #{basic_block_forward.3} parent=0 // loop_pre_header
    _
  $region3: #{basic_block_forward.3} parent=0 // loop_header
    %s10 = sphi 0, %s14
    %p11 = scmp.ge.s32.totalorder %s10, 4
    %s17 = sphi 0, %s29
    %s18 = sphi 0, %s25
    %s19 = sphi 0, %s17
    %s20 = sphi 0, %s18
    %s21 = sphi 0, %s19
    %s22 = sphi 0, %s20
    %s34 = sphi 0, %s36
    %s37 = sphi 0, %s34
    %s38 = sphi 0, %s37
    %s54 = sphi 0, %s38
    %s58 = sphi 0, %s58
    %s60 = sphi 0, %s58
    %s61 = sphi 0, %s60
    %s75 = sphi 0, %s61
    %s79 = sphi 0, %s79
    %s81 = sphi 0, %s79
    %s82 = sphi 0, %s81
    %s96 = sphi 0, %s82
    %s100 = sphi 0, %s100
    %s102 = sphi 0, %s100
    %s103 = sphi 0, %s102
    %s117 = sphi 0, %s103
    %s123 = sphi 0, %s125
    %s126 = sphi 0, %s123
    %s127 = sphi 0, %s126
    %s143 = sphi 0, %s127
  $region4: #{basic_block_forward.3} parent=0 // loop_header_branch
    %13 = sbr.rel (%p11) target = $region8
  $region5: #{basic_block_forward.3} parent=0 // loop_body
    %s15 = ssub.s32 %s10, 1
    %s16 = ssub.s32 %s10, 2
    %s23 = sadd.s32 1, %s18
    %p24 = scmp.ge.s32.totalorder %s23, 1
    %s25 = scalar_select %p24, 0, %s23
    %s26 = sadd.s32 1, %s17
    %s27 = scalar_select %p24, %s26, %s17
    %p28 = scmp.ge.s32.totalorder %s27, 2
    %s29 = scalar_select %p28, 0, %s27
    %s30 = ssub.s32 %s17, %s29
    %s31 = ssub.s32 %s18, %s25
    %s32 = sor.u32 %s30, %s31
    %p33 = scmp.eq.s32.totalorder %s32, 0
    %s35 = sadd.s32 %s34, 1
    %s36 = scalar_select %p33, %s34, %s35
    %p39 = pneg %p33
    %p40 = scmp.eq.s32.totalorder %s10, 1
    %p41 = por %p39, %p40
    %p42 = scmp.ne.s32.totalorder %s34, %s37
    %p43 = scmp.eq.s32.totalorder %s10, 0
    %p44 = por %p42, %p43
    %p45 = scmp.ne.s32.totalorder %s34, %s37
    %p46 = scmp.eq.s32.totalorder %s15, 1
    %p47 = por %p45, %p46
    %p48 = scmp.ne.s32.totalorder %s37, %s38
    %p49 = scmp.eq.s32.totalorder %s15, 0
    %p50 = por %p48, %p49
    %p51 = scmp.ne.s32.totalorder %s37, %s38
    %p52 = scmp.eq.s32.totalorder %s16, 1
    %p53 = por %p51, %p52
    %p55 = scmp.ne.s32.totalorder %s38, %s54
    %p56 = scmp.eq.s32.totalorder %s16, 0
    %p57 = por %p55, %p56
    %s59 = sadd.s32 %s58, 1
    %p62 = scmp.eq.s32.totalorder %s10, 1
    %p63 = scmp.ne.s32.totalorder %s58, %s60
    %p64 = scmp.eq.s32.totalorder %s10, 0
    %p65 = por %p63, %p64
    %p66 = scmp.ne.s32.totalorder %s58, %s60
    %p67 = scmp.eq.s32.totalorder %s15, 1
    %p68 = por %p66, %p67
    %p69 = scmp.ne.s32.totalorder %s60, %s61
    %p70 = scmp.eq.s32.totalorder %s15, 0
    %p71 = por %p69, %p70
    %p72 = scmp.ne.s32.totalorder %s60, %s61
    %p73 = scmp.eq.s32.totalorder %s16, 1
    %p74 = por %p72, %p73
    %p76 = scmp.ne.s32.totalorder %s61, %s75
    %p77 = scmp.eq.s32.totalorder %s16, 0
    %p78 = por %p76, %p77
    %s80 = sadd.s32 %s79, 1
    %p83 = scmp.eq.s32.totalorder %s10, 1
    %p84 = scmp.ne.s32.totalorder %s79, %s81
    %p85 = scmp.eq.s32.totalorder %s10, 0
    %p86 = por %p84, %p85
    %p87 = scmp.ne.s32.totalorder %s79, %s81
    %p88 = scmp.eq.s32.totalorder %s15, 1
    %p89 = por %p87, %p88
    %p90 = scmp.ne.s32.totalorder %s81, %s82
    %p91 = scmp.eq.s32.totalorder %s15, 0
    %p92 = por %p90, %p91
    %p93 = scmp.ne.s32.totalorder %s81, %s82
    %p94 = scmp.eq.s32.totalorder %s16, 1
    %p95 = por %p93, %p94
    %p97 = scmp.ne.s32.totalorder %s82, %s96
    %p98 = scmp.eq.s32.totalorder %s16, 0
    %p99 = por %p97, %p98
    %s101 = sadd.s32 %s100, 1
    %p104 = scmp.eq.s32.totalorder %s10, 1
    %p105 = scmp.ne.s32.totalorder %s100, %s102
    %p106 = scmp.eq.s32.totalorder %s10, 0
    %p107 = por %p105, %p106
    %p108 = scmp.ne.s32.totalorder %s100, %s102
    %p109 = scmp.eq.s32.totalorder %s15, 1
    %p110 = por %p108, %p109
    %p111 = scmp.ne.s32.totalorder %s102, %s103
    %p112 = scmp.eq.s32.totalorder %s15, 0
    %p113 = por %p111, %p112
    %p114 = scmp.ne.s32.totalorder %s102, %s103
    %p115 = scmp.eq.s32.totalorder %s16, 1
    %p116 = por %p114, %p115
    %p118 = scmp.ne.s32.totalorder %s103, %s117
    %p119 = scmp.eq.s32.totalorder %s16, 0
    %p120 = por %p118, %p119
    %s121 = ssub.s32 %s17, %s29
    %p122 = scmp.eq.s32.totalorder %s121, 0
    %s124 = sadd.s32 %s123, 1
    %s125 = scalar_select %p122, %s123, %s124
    %p128 = pneg %p122
    %p129 = scmp.eq.s32.totalorder %s10, 1
    %p130 = por %p128, %p129
    %p131 = scmp.ne.s32.totalorder %s123, %s126
    %p132 = scmp.eq.s32.totalorder %s10, 0
    %p133 = por %p131, %p132
    %p134 = scmp.ne.s32.totalorder %s123, %s126
    %p135 = scmp.eq.s32.totalorder %s15, 1
    %p136 = por %p134, %p135
    %p137 = scmp.ne.s32.totalorder %s126, %s127
    %p138 = scmp.eq.s32.totalorder %s15, 0
    %p139 = por %p137, %p138
    %p140 = scmp.ne.s32.totalorder %s126, %s127
    %p141 = scmp.eq.s32.totalorder %s16, 1
    %p142 = por %p140, %p141
    %p144 = scmp.ne.s32.totalorder %s127, %s143
    %p145 = scmp.eq.s32.totalorder %s16, 0
    %p146 = por %p144, %p145
    %p147 = scmp.le.s32.totalorder 1, %s10
    %p148 = scmp.lt.s32.totalorder %s10, 3
    %p149 = pnand %p147, %p148
    %p150 = pneg %p149
    // Predicated region
    $region9: #{basic_block_forward.3} parent=5 // pred_check
      _
    $region10: #{basic_block_forward.3} parent=5 // pred_check_branch
      %152 = sbr.rel (%p149) target = $region12
    $region11: #{basic_block_forward.3} parent=5 // pred_region
      %s153 = ssub.s32 %s10, 1
      // Predicated region
      $region13: #{basic_block_forward.3} parent=11 // pred_check
        %p154 = pneg %p71
      $region14: #{basic_block_forward.3} parent=11 // pred_check_branch
        %156 = sbr.rel (%p154) target = $region16
      $region15: #{basic_block_forward.3} parent=11 // pred_region
        _
      $region16: #{basic_block_forward.3} parent=11 // pred_fallthru
        _
      // Predicated region
      $region17: #{basic_block_forward.3} parent=11 // pred_check
        %p157 = pneg %p92
      $region18: #{basic_block_forward.3} parent=11 // pred_check_branch
        %159 = sbr.rel (%p157) target = $region20
      $region19: #{basic_block_forward.3} parent=11 // pred_region
        _
      $region20: #{basic_block_forward.3} parent=11 // pred_fallthru
        _
      // Predicated region
      $region21: #{basic_block_forward.3} parent=11 // pred_check
        %p160 = pneg %p113
      $region22: #{basic_block_forward.3} parent=11 // pred_check_branch
        %162 = sbr.rel (%p160) target = $region24
      $region23: #{basic_block_forward.3} parent=11 // pred_region
        _
      $region24: #{basic_block_forward.3} parent=11 // pred_fallthru
        _
    $region12: #{basic_block_forward.3} parent=5 // pred_fallthru
      _
    %p163 = scmp.lt.s32.totalorder %s10, 2
    // Predicated region
    $region25: #{basic_block_forward.3} parent=5 // pred_check
      %p164 = pneg %p163
    $region26: #{basic_block_forward.3} parent=5 // pred_check_branch
      %166 = sbr.rel (%p164) target = $region28
    $region27: #{basic_block_forward.3} parent=5 // pred_region
      // Predicated region
      $region29: #{basic_block_forward.3} parent=27 // pred_check
        %p167 = pneg %p44
      $region30: #{basic_block_forward.3} parent=27 // pred_check_branch
        %169 = sbr.rel (%p167) target = $region32
      $region31: #{basic_block_forward.3} parent=27 // pred_region
        %s170 = smul.u32 2, %s17
        %s171 = smul.u32 3, %s18
        %p172 = scmp.lt.s32.totalorder %s170, 3
        %s173 = scalar_select %p172, %s170, 3
        %p174 = scmp.lt.s32.totalorder %s171, 2
        %s175 = scalar_select %p174, %s171, 2
        %s176 = smul.addr %s173, 3
        %s177 = sadd.s32 %s175, %s176
        %s178 = smul.addr %s177, 4
        %s179 = scalar_lea.vmem %s0, %s178
        %s180 = smul.u32 2, %s17
        %s181 = smul.u32 3, %s18
      $region32: #{basic_block_forward.3} parent=27 // pred_fallthru
        _
    $region28: #{basic_block_forward.3} parent=5 // pred_fallthru
      _
    %p182 = scmp.le.s32.totalorder 1, %s10
    %p183 = scmp.lt.s32.totalorder %s10, 3
    %p184 = pnand %p182, %p183
    %p185 = pneg %p184
    // Predicated region
    $region33: #{basic_block_forward.3} parent=5 // pred_check
      _
    $region34: #{basic_block_forward.3} parent=5 // pred_check_branch
      %187 = sbr.rel (%p184) target = $region36
    $region35: #{basic_block_forward.3} parent=5 // pred_region
      %s188 = ssub.s32 %s10, 1
      %s189 = smul.u32 2, %s19
      %s190 = smul.u32 3, %s20
      %p191 = scmp.lt.s32.totalorder %s189, 3
      %s192 = scalar_select %p191, %s189, 3
      %p193 = scmp.lt.s32.totalorder %s190, 2
      %s194 = scalar_select %p193, %s190, 2
      %s195 = smul.addr %s192, 3
      %s196 = sadd.s32 %s194, %s195
      %s197 = smul.addr %s196, 4
      %s198 = scalar_lea.vmem %s0, %s197
      %p199 = pneg %p50
      %p200 = pneg %p47
      %p201 = pneg %p71
      %p202 = pneg %p68
      %p203 = pneg %p92
      %p204 = pneg %p89
      %p205 = pneg %p113
      %p206 = pneg %p110
      %p207 = pneg %p139
      %p208 = pneg %p136
      %s209 = smul.u32 2, %s19
      %p210 = scmp.lt.s32.totalorder %s209, 3
      %s211 = scalar_select %p210, %s209, 3
      %s212 = smul.addr %s211, 4
      %s213 = scalar_lea.vmem %s4, %s212
      %s214 = smul.u32 2, %s19
      %s215 = smul.u32 3, %s20
      %p216 = scmp.lt.s32.totalorder %s214, 3
      %s217 = scalar_select %p216, %s214, 3
      %p218 = scmp.lt.s32.totalorder %s215, 2
      %s219 = scalar_select %p218, %s215, 2
      %s220 = smul.addr %s217, 3
      %s221 = sadd.s32 %s219, %s220
      %s222 = smul.addr %s221, 4
      %s223 = scalar_lea.vmem %s0, %s222
      %s224 = smul.u32 2, %s19
      %s225 = smul.u32 3, %s20
      %s226 = smul.u32 2, %s19
      %p227 = scmp.lt.s32.totalorder %s226, 3
      %s228 = scalar_select %p227, %s226, 3
      %s229 = smul.addr %s228, 4
      %s230 = scalar_lea.vmem %s4, %s229
      %s231 = smul.u32 2, %s19
      %p233 = scmp.eq.s32.totalorder %s20, 0
      // Predicated region
      $region37: #{basic_block_forward.3} parent=35 // pred_check
        %p234 = pneg %p233
      $region38: #{basic_block_forward.3} parent=35 // pred_check_branch
        %236 = sbr.rel (%p234) target = $region40
      $region39: #{basic_block_forward.3} parent=35 // pred_region
        %237 = vst [vmem:[#allocation2] sm:$0xff] 0.0
        %238 = vst [vmem:[#allocation2 + $0x8] sm:$0xff] 0.0
      $region40: #{basic_block_forward.3} parent=35 // pred_fallthru
        _
      %s239 = smul.u32 %s20, 384
      %s240 = sshra.s32 %s239, 3
      %s241 = sand.u32 %s239, 7
      %s242 = smul.addr %s240, 4
      %s243 = scalar_lea.vmem %s1, %s242
      %v244 = vld [vmem:[%s243] sm:$0xf]
      %v245 = vld [vmem:[%s243 + $0x4] sm:$0xf]
      %v246 = vld [vmem:[%s243 + $0x8] sm:$0xf]
      %v247 = vld [vmem:[%s243 + $0xc] sm:$0xf]
      %v248 = vld [vmem:[%s243 + $0x10] sm:$0xf]
      %v249 = vld [vmem:[%s243 + $0x14] sm:$0xf]
      %v250 = vld [vmem:[%s243 + $0x18] sm:$0xf]
      %v251 = vld [vmem:[%s243 + $0x1c] sm:$0xf]
      %v252 = vld [vmem:[%s243 + $0x20] sm:$0xf]
      %v253 = vld [vmem:[%s243 + $0x24] sm:$0xf]
      %v254 = vld [vmem:[%s243 + $0x28] sm:$0xf]
      %v255 = vld [vmem:[%s243 + $0x2c] sm:$0xf]
      %v256 = vld [vmem:[%s243 + $0x30] sm:$0xf]
      %v257 = vld [vmem:[%s243 + $0x34] sm:$0xf]
      %v258 = vld [vmem:[%s243 + $0x38] sm:$0xf]
      %v259 = vld [vmem:[%s243 + $0x3c] sm:$0xf]
      %v260 = vld [vmem:[%s243 + $0x40] sm:$0xf]
      %v261 = vld [vmem:[%s243 + $0x44] sm:$0xf]
      %v262 = vld [vmem:[%s243 + $0x48] sm:$0xf]
      %v263 = vld [vmem:[%s243 + $0x4c] sm:$0xf]
      %v264 = vld [vmem:[%s243 + $0x50] sm:$0xf]
      %v265 = vld [vmem:[%s243 + $0x54] sm:$0xf]
      %v266 = vld [vmem:[%s243 + $0x58] sm:$0xf]
      %v267 = vld [vmem:[%s243 + $0x5c] sm:$0xf]
      %v268 = vld [vmem:[%s243 + $0x60] sm:$0xf]
      %v269 = vld [vmem:[%s243 + $0x64] sm:$0xf]
      %v270 = vld [vmem:[%s243 + $0x68] sm:$0xf]
      %v271 = vld [vmem:[%s243 + $0x6c] sm:$0xf]
      %v272 = vld [vmem:[%s243 + $0x70] sm:$0xf]
      %v273 = vld [vmem:[%s243 + $0x74] sm:$0xf]
      %v274 = vld [vmem:[%s243 + $0x78] sm:$0xf]
      %v275 = vld [vmem:[%s243 + $0x7c] sm:$0xf]
      %v276 = vld [vmem:[%s243 + $0x80] sm:$0xf]
      %v277 = vld [vmem:[%s243 + $0x84] sm:$0xf]
      %v278 = vld [vmem:[%s243 + $0x88] sm:$0xf]
      %v279 = vld [vmem:[%s243 + $0x8c] sm:$0xf]
      %v280 = vld [vmem:[%s243 + $0x90] sm:$0xf]
      %v281 = vld [vmem:[%s243 + $0x94] sm:$0xf]
      %v282 = vld [vmem:[%s243 + $0x98] sm:$0xf]
      %v283 = vld [vmem:[%s243 + $0x9c] sm:$0xf]
      %v284 = vld [vmem:[%s243 + $0xa0] sm:$0xf]
      %v285 = vld [vmem:[%s243 + $0xa4] sm:$0xf]
      %v286 = vld [vmem:[%s243 + $0xa8] sm:$0xf]
      %v287 = vld [vmem:[%s243 + $0xac] sm:$0xf]
      %v288 = vld [vmem:[%s243 + $0xb0] sm:$0xf]
      %v289 = vld [vmem:[%s243 + $0xb4] sm:$0xf]
      %v290 = vld [vmem:[%s243 + $0xb8] sm:$0xf]
      %v291 = vld [vmem:[%s243 + $0xbc] sm:$0xf]
      %v292 = vld [vmem:[#allocation2] sm:$0xff]
      %v293 = vld [vmem:[#allocation2 + $0x8] sm:$0xff]
      %v294 = vld [vmem:[%s223] sm:$0xff]
      %v295 = vld [vmem:[%s223 + $0x8] sm:$0xf]
      %v296 = vld [vmem:[%s223 + $0xc] sm:$0xff]
      %v297 = vld [vmem:[%s223 + $0x14] sm:$0xf]
      %v302 = vunpack.c.l.b16 %v294
      %v303 = vunpack.c.h.b16 %v294
      %v304 = vunpack.c.l.b16 %v295
      %v305 = vunpack.c.l.b16 %v296
      %v306 = vunpack.c.h.b16 %v296
      %v307 = vunpack.c.l.b16 %v297
      %v308 = vpack.c.b16 %v305, %v302
      %v309 = vpack.c.b16 %v306, %v303
      %v310 = vpack.c.b16 %v307, %v304
      %v362 = vunpack.c.l.b16 %v244
      %v363 = vunpack.c.l.b16 %v245
      %v364 = vunpack.c.l.b16 %v246
      %v365 = vunpack.c.l.b16 %v247
      %v366 = vunpack.c.l.b16 %v248
      %v367 = vunpack.c.l.b16 %v249
      %v368 = vunpack.c.l.b16 %v250
      %v369 = vunpack.c.l.b16 %v251
      %v370 = vunpack.c.l.b16 %v252
      %v371 = vunpack.c.l.b16 %v253
      %v372 = vunpack.c.l.b16 %v254
      %v373 = vunpack.c.l.b16 %v255
      %v374 = vunpack.c.l.b16 %v256
      %v375 = vunpack.c.l.b16 %v257
      %v376 = vunpack.c.l.b16 %v258
      %v377 = vunpack.c.l.b16 %v259
      %v378 = vunpack.c.l.b16 %v260
      %v379 = vunpack.c.l.b16 %v261
      %v380 = vunpack.c.l.b16 %v262
      %v381 = vunpack.c.l.b16 %v263
      %v382 = vunpack.c.l.b16 %v264
      %v383 = vunpack.c.l.b16 %v265
      %v384 = vunpack.c.l.b16 %v266
      %v385 = vunpack.c.l.b16 %v267
      %v386 = vunpack.c.l.b16 %v268
      %v387 = vunpack.c.l.b16 %v269
      %v388 = vunpack.c.l.b16 %v270
      %v389 = vunpack.c.l.b16 %v271
      %v390 = vunpack.c.l.b16 %v272
      %v391 = vunpack.c.l.b16 %v273
      %v392 = vunpack.c.l.b16 %v274
      %v393 = vunpack.c.l.b16 %v275
      %v394 = vunpack.c.l.b16 %v276
      %v395 = vunpack.c.l.b16 %v277
      %v396 = vunpack.c.l.b16 %v278
      %v397 = vunpack.c.l.b16 %v279
      %v398 = vunpack.c.l.b16 %v280
      %v399 = vunpack.c.l.b16 %v281
      %v400 = vunpack.c.l.b16 %v282
      %v401 = vunpack.c.l.b16 %v283
      %v402 = vunpack.c.l.b16 %v284
      %v403 = vunpack.c.l.b16 %v285
      %v404 = vunpack.c.l.b16 %v286
      %v405 = vunpack.c.l.b16 %v287
      %v406 = vunpack.c.l.b16 %v288
      %v407 = vunpack.c.l.b16 %v289
      %v408 = vunpack.c.l.b16 %v290
      %v409 = vunpack.c.l.b16 %v291
      %v410 = vpack.c.b16 %v363, %v362
      %v411 = vpack.c.b16 %v365, %v364
      %v412 = vpack.c.b16 %v367, %v366
      %v413 = vpack.c.b16 %v369, %v368
      %v414 = vpack.c.b16 %v371, %v370
      %v415 = vpack.c.b16 %v373, %v372
      %v416 = vpack.c.b16 %v375, %v374
      %v417 = vpack.c.b16 %v377, %v376
      %v418 = vpack.c.b16 %v379, %v378
      %v419 = vpack.c.b16 %v381, %v380
      %v420 = vpack.c.b16 %v383, %v382
      %v421 = vpack.c.b16 %v385, %v384
      %v422 = vpack.c.b16 %v387, %v386
      %v423 = vpack.c.b16 %v389, %v388
      %v424 = vpack.c.b16 %v391, %v390
      %v425 = vpack.c.b16 %v393, %v392
      %v426 = vpack.c.b16 %v395, %v394
      %v427 = vpack.c.b16 %v397, %v396
      %v428 = vpack.c.b16 %v399, %v398
      %v429 = vpack.c.b16 %v401, %v400
      %v430 = vpack.c.b16 %v403, %v402
      %v431 = vpack.c.b16 %v405, %v404
      %v432 = vpack.c.b16 %v407, %v406
      %v433 = vpack.c.b16 %v409, %v408
      %458 = vmatprep.subr.bf16.mxu0 0
      %459 = vmatpush1.bf16.msra.mxu0 %v410
      %460 = vmatprep.subr.bf16.mxu0 0
      %461 = vmatpush1.bf16.msra.mxu0 %v411
      %462 = vmatprep.subr.bf16.mxu0 0
      %463 = vmatpush1.bf16.msra.mxu0 %v412
      %464 = vmatprep.subr.bf16.mxu0 0
      %465 = vmatpush1.bf16.msra.mxu0 %v413
      %466 = vmatprep.subr.bf16.mxu0 0
      %467 = vmatpush1.bf16.msra.mxu0 %v414
      %468 = vmatprep.subr.bf16.mxu0 0
      %469 = vmatpush1.bf16.msra.mxu0 %v415
      %470 = vmatprep.subr.bf16.mxu0 0
      %471 = vmatpush1.bf16.msra.mxu0 %v416
      %472 = vmatprep.subr.bf16.mxu0 0
      %473 = vmatpush1.bf16.msra.mxu0 %v417
      %474 = vmatprep.subr.bf16.mxu0 0
      %475 = vmatpush1.bf16.msra.mxu0 %v418
      %476 = vmatprep.subr.bf16.mxu0 0
      %477 = vmatpush1.bf16.msra.mxu0 %v419
      %478 = vmatprep.subr.bf16.mxu0 0
      %479 = vmatpush1.bf16.msra.mxu0 %v420
      %480 = vmatprep.subr.bf16.mxu0 0
      %481 = vmatpush1.bf16.msra.mxu0 %v421
      %482 = vmatprep.subr.bf16.mxu0 0
      %483 = vmatpush1.bf16.msra.mxu0 %v422
      %484 = vmatprep.subr.bf16.mxu0 0
      %485 = vmatpush1.bf16.msra.mxu0 %v423
      %486 = vmatprep.subr.bf16.mxu0 0
      %487 = vmatpush1.bf16.msra.mxu0 %v424
      %488 = vmatprep.subr.bf16.mxu0 0
      %489 = vmatpush1.bf16.msra.mxu0 %v425
      %490 = vmatprep.mubr.bf16.mxu0 %v309
      %491 = vmatmul.mubr.bf16.gmra.mrb[0].mxu0 %v308
      %v492 = vpop.f32.mrb[0].mxu0
      %v493 = vadd.f32 0.0, %v492
      %v494 = vpop.f32.mrb[0].mxu0
      %v495 = vpop.f32.mrb[0].mxu0
      %v496 = vadd.f32 0.0, %v495
      %v497 = vpop.f32.mrb[0].mxu0
      %498 = vdwg.mxu0
      %499 = vmatprep.subr.bf16.mxu0 0
      %500 = vmatpush1.bf16.msra.mxu0 %v426
      %501 = vmatprep.subr.bf16.mxu0 0
      %502 = vmatpush1.bf16.msra.mxu0 %v427
      %503 = vmatprep.subr.bf16.mxu0 0
      %504 = vmatpush1.bf16.msra.mxu0 %v428
      %505 = vmatprep.subr.bf16.mxu0 0
      %506 = vmatpush1.bf16.msra.mxu0 %v429
      %507 = vmatprep.subr.bf16.mxu0 0
      %508 = vmatpush1.bf16.msra.mxu0 %v430
      %509 = vmatprep.subr.bf16.mxu0 0
      %510 = vmatpush1.bf16.msra.mxu0 %v431
      %511 = vmatprep.subr.bf16.mxu0 0
      %512 = vmatpush1.bf16.msra.mxu0 %v432
      %513 = vmatprep.subr.bf16.mxu0 0
      %514 = vmatpush1.bf16.msra.mxu0 %v433
      %515 = vmatprep.subr.bf16.mxu0 0
      %516 = vmatpush1.bf16.msra.mxu0 0
      %517 = vmatprep.subr.bf16.mxu0 0
      %518 = vmatpush1.bf16.msra.mxu0 0
      %519 = vmatprep.subr.bf16.mxu0 0
      %520 = vmatpush1.bf16.msra.mxu0 0
      %521 = vmatprep.subr.bf16.mxu0 0
      %522 = vmatpush1.bf16.msra.mxu0 0
      %523 = vmatprep.subr.bf16.mxu0 0
      %524 = vmatpush1.bf16.msra.mxu0 0
      %525 = vmatprep.subr.bf16.mxu0 0
      %526 = vmatpush1.bf16.msra.mxu0 0
      %527 = vmatprep.subr.bf16.mxu0 0
      %528 = vmatpush1.bf16.msra.mxu0 0
      %529 = vmatprep.subr.bf16.mxu0 0
      %530 = vmatpush1.bf16.msra.mxu0 0
      %531 = vmatprep.mubr.bf16.mxu0 0
      %532 = vmatmul.mubr.bf16.gmra.mrb[0].mxu0 %v310
      %v533 = vpop.f32.mrb[0].mxu0
      %v534 = vadd.f32 %v493, %v533
      %v535 = vpop.f32.mrb[0].mxu0
      %v536 = vpop.f32.mrb[0].mxu0
      %v537 = vadd.f32 %v496, %v536
      %v538 = vpop.f32.mrb[0].mxu0
      %539 = vdwg.mxu0
      %v540 = vadd.f32 %v292, %v534
      %v541 = vadd.f32 %v293, %v537
      %542 = vst [vmem:[#allocation2] sm:$0xff] %v540
      %543 = vst [vmem:[#allocation2 + $0x8] sm:$0xff] %v541
      // Predicated region
      $region41: #{basic_block_forward.3} parent=35 // pred_check
        %p544 = pneg %p233
      $region42: #{basic_block_forward.3} parent=35 // pred_check_branch
        %546 = sbr.rel (%p544) target = $region44
      $region43: #{basic_block_forward.3} parent=35 // pred_region
        %v547 = vld [vmem:[#allocation2] sm:$0xff]
        %v548 = vld [vmem:[#allocation2 + $0x8] sm:$0xff]
        %v549 = vld [vmem:[%s2] sm:$0x1]
        %v551 = vlaneseq
        %v552 = vshrl.u32 %v551, 7
        %v553 = vsub.s32 0, %v552
        %v554 = vrot.slane %v549, %v553
        %v556 = vmul.f32 %v547, %v554
        %v557 = vmul.f32 %v548, %v554
        %v558 = vld [vmem:[%s3] sm:$0x1]
        %v560 = vlaneseq
        %v561 = vshrl.u32 %v560, 7
        %v562 = vsub.s32 0, %v561
        %v563 = vrot.slane %v558, %v562
        %v565 = vadd.f32 %v556, %v563
        %v566 = vadd.f32 %v557, %v563
        %v567 = vmax.f32 %v565, 0.0
        %v568 = vmax.f32 %v566, 0.0
        %v569 = vpack.c.bf16 %v568, %v567
        %v571 = vunpack.c.l.b16 %v569
        %v572 = vunpack.c.h.b16 %v569
        %v573 = vpack.c.b16 %v571, %v571
        %v574 = vpack.c.b16 %v572, %v572
        %577 = vst [vmem:[%s230] sm:$0xf] %v573
        %578 = vst [vmem:[%s230 + $0x4] sm:$0xf] %v574
      $region44: #{basic_block_forward.3} parent=35 // pred_fallthru
        _
      %s579 = smul.u32 2, %s19
      %p580 = scmp.lt.s32.totalorder %s579, 3
      %s581 = scalar_select %p580, %s579, 3
      %s582 = smul.addr %s581, 4
      %s583 = scalar_lea.vmem %s4, %s582
      // Predicated region
      $region45: #{basic_block_forward.3} parent=35 // pred_check
        %p584 = pneg %p136
      $region46: #{basic_block_forward.3} parent=35 // pred_check_branch
        %586 = sbr.rel (%p584) target = $region48
      $region47: #{basic_block_forward.3} parent=35 // pred_region
        %s587 = smul.u32 2, %s19
      $region48: #{basic_block_forward.3} parent=35 // pred_fallthru
        _
    $region36: #{basic_block_forward.3} parent=5 // pred_fallthru
      _
    %p588 = scmp.le.s32.totalorder 2, %s10
    // Predicated region
    $region49: #{basic_block_forward.3} parent=5 // pred_check
      %p589 = pneg %p588
    $region50: #{basic_block_forward.3} parent=5 // pred_check_branch
      %591 = sbr.rel (%p589) target = $region52
    $region51: #{basic_block_forward.3} parent=5 // pred_region
      %s592 = ssub.s32 %s10, 2
      // Predicated region
      $region53: #{basic_block_forward.3} parent=51 // pred_check
        %p593 = pneg %p142
      $region54: #{basic_block_forward.3} parent=51 // pred_check_branch
        %595 = sbr.rel (%p593) target = $region56
      $region55: #{basic_block_forward.3} parent=51 // pred_region
        %s596 = smul.u32 2, %s21
        %p597 = scmp.lt.s32.totalorder %s596, 3
        %s598 = scalar_select %p597, %s596, 3
        %s599 = smul.addr %s598, 4
        %s600 = scalar_lea.vmem %s4, %s599
      $region56: #{basic_block_forward.3} parent=51 // pred_fallthru
        _
    $region52: #{basic_block_forward.3} parent=5 // pred_fallthru
      _
  $region6: #{basic_block_forward.3} parent=0 // loop_footer
    %s14 = sadd.s32 1, %s10
  $region7: #{basic_block_forward.3} parent=0 // loop_footer_branch
    %9 = sbr.rel target = $region3
  $region8: #{basic_block_forward.3} parent=0 // loop_exit
    _

// kernel: basic_block_forward.4
$region0: #{basic_block_forward.4}
  #allocation0 [shape = 'u32[]', space=smem, size = 0x4, offset = 0x4, fixed_abs, tag = 'smem constant byte address 0x4 - core index']
  #allocation1 [shape = 'u32[144,128]{1,0:T(1,128)}', space=vmem, size = 0x12000, scoped, tag = 'internal scratch']
  #allocation2 [shape = 'f32[16,128]{1,0:T(8,128)}', space=vmem, size = 0x2000, scoped, tag = 'scratch operand']
  %s0 = inlined_call_operand.vmem [shape: bf16[32,128], index: 0, kind: input, shape index: {}]
  %s1 = inlined_call_operand.vmem [shape: bf16[128,128], index: 1, kind: input, shape index: {}]
  %s2 = inlined_call_operand.vmem [shape: f32[1,128], index: 2, kind: input, shape index: {}]
  %s3 = inlined_call_operand.vmem [shape: f32[1,128], index: 3, kind: input, shape index: {}]
  %s4 = inlined_call_operand.vmem [shape: bf16[32,128], index: 4, kind: output, shape index: {}]
  %s5 = sld [smem:[#allocation0]]
  $region57: #{basic_block_forward.4} parent=0
    _
  %s7 = ssub.s32 1, %s5
  %s8 = scalar_select 0, %s7, %s5
  loop: start=0, step=1, limit=4
  $region2: #{basic_block_forward.4} parent=0 // loop_pre_header
    _
  $region3: #{basic_block_forward.4} parent=0 // loop_header
    %s10 = sphi 0, %s14
    %p11 = scmp.ge.s32.totalorder %s10, 4
    %s17 = sphi 0, %s29
    %s18 = sphi 0, %s25
    %s19 = sphi 0, %s17
    %s20 = sphi 0, %s18
    %s21 = sphi 0, %s19
    %s22 = sphi 0, %s20
    %s34 = sphi 0, %s36
    %s37 = sphi 0, %s34
    %s38 = sphi 0, %s37
    %s54 = sphi 0, %s38
    %s58 = sphi 0, %s58
    %s60 = sphi 0, %s58
    %s61 = sphi 0, %s60
    %s75 = sphi 0, %s61
    %s79 = sphi 0, %s79
    %s81 = sphi 0, %s79
    %s82 = sphi 0, %s81
    %s96 = sphi 0, %s82
    %s100 = sphi 0, %s100
    %s102 = sphi 0, %s100
    %s103 = sphi 0, %s102
    %s117 = sphi 0, %s103
    %s123 = sphi 0, %s125
    %s126 = sphi 0, %s123
    %s127 = sphi 0, %s126
    %s143 = sphi 0, %s127
  $region4: #{basic_block_forward.4} parent=0 // loop_header_branch
    %13 = sbr.rel (%p11) target = $region8
  $region5: #{basic_block_forward.4} parent=0 // loop_body
    %s15 = ssub.s32 %s10, 1
    %s16 = ssub.s32 %s10, 2
    %s23 = sadd.s32 1, %s18
    %p24 = scmp.ge.s32.totalorder %s23, 1
    %s25 = scalar_select %p24, 0, %s23
    %s26 = sadd.s32 1, %s17
    %s27 = scalar_select %p24, %s26, %s17
    %p28 = scmp.ge.s32.totalorder %s27, 2
    %s29 = scalar_select %p28, 0, %s27
    %s30 = ssub.s32 %s17, %s29
    %s31 = ssub.s32 %s18, %s25
    %s32 = sor.u32 %s30, %s31
    %p33 = scmp.eq.s32.totalorder %s32, 0
    %s35 = sadd.s32 %s34, 1
    %s36 = scalar_select %p33, %s34, %s35
    %p39 = pneg %p33
    %p40 = scmp.eq.s32.totalorder %s10, 1
    %p41 = por %p39, %p40
    %p42 = scmp.ne.s32.totalorder %s34, %s37
    %p43 = scmp.eq.s32.totalorder %s10, 0
    %p44 = por %p42, %p43
    %p45 = scmp.ne.s32.totalorder %s34, %s37
    %p46 = scmp.eq.s32.totalorder %s15, 1
    %p47 = por %p45, %p46
    %p48 = scmp.ne.s32.totalorder %s37, %s38
    %p49 = scmp.eq.s32.totalorder %s15, 0
    %p50 = por %p48, %p49
    %p51 = scmp.ne.s32.totalorder %s37, %s38
    %p52 = scmp.eq.s32.totalorder %s16, 1
    %p53 = por %p51, %p52
    %p55 = scmp.ne.s32.totalorder %s38, %s54
    %p56 = scmp.eq.s32.totalorder %s16, 0
    %p57 = por %p55, %p56
    %s59 = sadd.s32 %s58, 1
    %p62 = scmp.eq.s32.totalorder %s10, 1
    %p63 = scmp.ne.s32.totalorder %s58, %s60
    %p64 = scmp.eq.s32.totalorder %s10, 0
    %p65 = por %p63, %p64
    %p66 = scmp.ne.s32.totalorder %s58, %s60
    %p67 = scmp.eq.s32.totalorder %s15, 1
    %p68 = por %p66, %p67
    %p69 = scmp.ne.s32.totalorder %s60, %s61
    %p70 = scmp.eq.s32.totalorder %s15, 0
    %p71 = por %p69, %p70
    %p72 = scmp.ne.s32.totalorder %s60, %s61
    %p73 = scmp.eq.s32.totalorder %s16, 1
    %p74 = por %p72, %p73
    %p76 = scmp.ne.s32.totalorder %s61, %s75
    %p77 = scmp.eq.s32.totalorder %s16, 0
    %p78 = por %p76, %p77
    %s80 = sadd.s32 %s79, 1
    %p83 = scmp.eq.s32.totalorder %s10, 1
    %p84 = scmp.ne.s32.totalorder %s79, %s81
    %p85 = scmp.eq.s32.totalorder %s10, 0
    %p86 = por %p84, %p85
    %p87 = scmp.ne.s32.totalorder %s79, %s81
    %p88 = scmp.eq.s32.totalorder %s15, 1
    %p89 = por %p87, %p88
    %p90 = scmp.ne.s32.totalorder %s81, %s82
    %p91 = scmp.eq.s32.totalorder %s15, 0
    %p92 = por %p90, %p91
    %p93 = scmp.ne.s32.totalorder %s81, %s82
    %p94 = scmp.eq.s32.totalorder %s16, 1
    %p95 = por %p93, %p94
    %p97 = scmp.ne.s32.totalorder %s82, %s96
    %p98 = scmp.eq.s32.totalorder %s16, 0
    %p99 = por %p97, %p98
    %s101 = sadd.s32 %s100, 1
    %p104 = scmp.eq.s32.totalorder %s10, 1
    %p105 = scmp.ne.s32.totalorder %s100, %s102
    %p106 = scmp.eq.s32.totalorder %s10, 0
    %p107 = por %p105, %p106
    %p108 = scmp.ne.s32.totalorder %s100, %s102
    %p109 = scmp.eq.s32.totalorder %s15, 1
    %p110 = por %p108, %p109
    %p111 = scmp.ne.s32.totalorder %s102, %s103
    %p112 = scmp.eq.s32.totalorder %s15, 0
    %p113 = por %p111, %p112
    %p114 = scmp.ne.s32.totalorder %s102, %s103
    %p115 = scmp.eq.s32.totalorder %s16, 1
    %p116 = por %p114, %p115
    %p118 = scmp.ne.s32.totalorder %s103, %s117
    %p119 = scmp.eq.s32.totalorder %s16, 0
    %p120 = por %p118, %p119
    %s121 = ssub.s32 %s17, %s29
    %p122 = scmp.eq.s32.totalorder %s121, 0
    %s124 = sadd.s32 %s123, 1
    %s125 = scalar_select %p122, %s123, %s124
    %p128 = pneg %p122
    %p129 = scmp.eq.s32.totalorder %s10, 1
    %p130 = por %p128, %p129
    %p131 = scmp.ne.s32.totalorder %s123, %s126
    %p132 = scmp.eq.s32.totalorder %s10, 0
    %p133 = por %p131, %p132
    %p134 = scmp.ne.s32.totalorder %s123, %s126
    %p135 = scmp.eq.s32.totalorder %s15, 1
    %p136 = por %p134, %p135
    %p137 = scmp.ne.s32.totalorder %s126, %s127
    %p138 = scmp.eq.s32.totalorder %s15, 0
    %p139 = por %p137, %p138
    %p140 = scmp.ne.s32.totalorder %s126, %s127
    %p141 = scmp.eq.s32.totalorder %s16, 1
    %p142 = por %p140, %p141
    %p144 = scmp.ne.s32.totalorder %s127, %s143
    %p145 = scmp.eq.s32.totalorder %s16, 0
    %p146 = por %p144, %p145
    %p147 = scmp.le.s32.totalorder 1, %s10
    %p148 = scmp.lt.s32.totalorder %s10, 3
    %p149 = pnand %p147, %p148
    %p150 = pneg %p149
    // Predicated region
    $region9: #{basic_block_forward.4} parent=5 // pred_check
      _
    $region10: #{basic_block_forward.4} parent=5 // pred_check_branch
      %152 = sbr.rel (%p149) target = $region12
    $region11: #{basic_block_forward.4} parent=5 // pred_region
      %s153 = ssub.s32 %s10, 1
      // Predicated region
      $region13: #{basic_block_forward.4} parent=11 // pred_check
        %p154 = pneg %p71
      $region14: #{basic_block_forward.4} parent=11 // pred_check_branch
        %156 = sbr.rel (%p154) target = $region16
      $region15: #{basic_block_forward.4} parent=11 // pred_region
        _
      $region16: #{basic_block_forward.4} parent=11 // pred_fallthru
        _
      // Predicated region
      $region17: #{basic_block_forward.4} parent=11 // pred_check
        %p157 = pneg %p92
      $region18: #{basic_block_forward.4} parent=11 // pred_check_branch
        %159 = sbr.rel (%p157) target = $region20
      $region19: #{basic_block_forward.4} parent=11 // pred_region
        _
      $region20: #{basic_block_forward.4} parent=11 // pred_fallthru
        _
      // Predicated region
      $region21: #{basic_block_forward.4} parent=11 // pred_check
        %p160 = pneg %p113
      $region22: #{basic_block_forward.4} parent=11 // pred_check_branch
        %162 = sbr.rel (%p160) target = $region24
      $region23: #{basic_block_forward.4} parent=11 // pred_region
        _
      $region24: #{basic_block_forward.4} parent=11 // pred_fallthru
        _
    $region12: #{basic_block_forward.4} parent=5 // pred_fallthru
      _
    %p163 = scmp.lt.s32.totalorder %s10, 2
    // Predicated region
    $region25: #{basic_block_forward.4} parent=5 // pred_check
      %p164 = pneg %p163
    $region26: #{basic_block_forward.4} parent=5 // pred_check_branch
      %166 = sbr.rel (%p164) target = $region28
    $region27: #{basic_block_forward.4} parent=5 // pred_region
      // Predicated region
      $region29: #{basic_block_forward.4} parent=27 // pred_check
        %p167 = pneg %p44
      $region30: #{basic_block_forward.4} parent=27 // pred_check_branch
        %169 = sbr.rel (%p167) target = $region32
      $region31: #{basic_block_forward.4} parent=27 // pred_region
        %s170 = smul.u32 2, %s17
        %p171 = scmp.lt.s32.totalorder %s170, 3
        %s172 = scalar_select %p171, %s170, 3
        %p173 = scmp.lt.s32.totalorder %s18, 0
        %s174 = scalar_select %p173, %s18, 0
        %s175 = sadd.s32 %s174, %s172
        %s176 = smul.addr %s175, 4
        %s177 = scalar_lea.vmem %s0, %s176
        %s178 = smul.u32 2, %s17
      $region32: #{basic_block_forward.4} parent=27 // pred_fallthru
        _
    $region28: #{basic_block_forward.4} parent=5 // pred_fallthru
      _
    %p179 = scmp.le.s32.totalorder 1, %s10
    %p180 = scmp.lt.s32.totalorder %s10, 3
    %p181 = pnand %p179, %p180
    %p182 = pneg %p181
    // Predicated region
    $region33: #{basic_block_forward.4} parent=5 // pred_check
      _
    $region34: #{basic_block_forward.4} parent=5 // pred_check_branch
      %184 = sbr.rel (%p181) target = $region36
    $region35: #{basic_block_forward.4} parent=5 // pred_region
      %s185 = ssub.s32 %s10, 1
      %s186 = smul.u32 2, %s19
      %p187 = scmp.lt.s32.totalorder %s186, 3
      %s188 = scalar_select %p187, %s186, 3
      %p189 = scmp.lt.s32.totalorder %s20, 0
      %s190 = scalar_select %p189, %s20, 0
      %s191 = sadd.s32 %s190, %s188
      %s192 = smul.addr %s191, 4
      %s193 = scalar_lea.vmem %s0, %s192
      %p194 = pneg %p50
      %p195 = pneg %p47
      %p196 = pneg %p71
      %p197 = pneg %p68
      %p198 = pneg %p92
      %p199 = pneg %p89
      %p200 = pneg %p113
      %p201 = pneg %p110
      %p202 = pneg %p139
      %p203 = pneg %p136
      %s204 = smul.u32 2, %s19
      %p205 = scmp.lt.s32.totalorder %s204, 3
      %s206 = scalar_select %p205, %s204, 3
      %s207 = smul.addr %s206, 4
      %s208 = scalar_lea.vmem %s4, %s207
      %s209 = smul.u32 2, %s19
      %p210 = scmp.lt.s32.totalorder %s209, 3
      %s211 = scalar_select %p210, %s209, 3
      %p212 = scmp.lt.s32.totalorder %s20, 0
      %s213 = scalar_select %p212, %s20, 0
      %s214 = sadd.s32 %s213, %s211
      %s215 = smul.addr %s214, 4
      %s216 = scalar_lea.vmem %s0, %s215
      %s217 = smul.u32 2, %s19
      %s218 = smul.u32 2, %s19
      %p219 = scmp.lt.s32.totalorder %s218, 3
      %s220 = scalar_select %p219, %s218, 3
      %s221 = smul.addr %s220, 4
      %s222 = scalar_lea.vmem %s4, %s221
      %s223 = smul.u32 2, %s19
      %p225 = scmp.eq.s32.totalorder %s20, 0
      // Predicated region
      $region37: #{basic_block_forward.4} parent=35 // pred_check
        %p226 = pneg %p225
      $region38: #{basic_block_forward.4} parent=35 // pred_check_branch
        %228 = sbr.rel (%p226) target = $region40
      $region39: #{basic_block_forward.4} parent=35 // pred_region
        %229 = vst [vmem:[#allocation2] sm:$0xff] 0.0
        %230 = vst [vmem:[#allocation2 + $0x8] sm:$0xff] 0.0
      $region40: #{basic_block_forward.4} parent=35 // pred_fallthru
        _
      %s231 = smul.u32 %s20, 128
      %s232 = sshra.s32 %s231, 3
      %s233 = sand.u32 %s231, 7
      %s234 = smul.addr %s232, 4
      %s235 = scalar_lea.vmem %s1, %s234
      %v236 = vld [vmem:[%s235] sm:$0xf]
      %v237 = vld [vmem:[%s235 + $0x4] sm:$0xf]
      %v238 = vld [vmem:[%s235 + $0x8] sm:$0xf]
      %v239 = vld [vmem:[%s235 + $0xc] sm:$0xf]
      %v240 = vld [vmem:[%s235 + $0x10] sm:$0xf]
      %v241 = vld [vmem:[%s235 + $0x14] sm:$0xf]
      %v242 = vld [vmem:[%s235 + $0x18] sm:$0xf]
      %v243 = vld [vmem:[%s235 + $0x1c] sm:$0xf]
      %v244 = vld [vmem:[%s235 + $0x20] sm:$0xf]
      %v245 = vld [vmem:[%s235 + $0x24] sm:$0xf]
      %v246 = vld [vmem:[%s235 + $0x28] sm:$0xf]
      %v247 = vld [vmem:[%s235 + $0x2c] sm:$0xf]
      %v248 = vld [vmem:[%s235 + $0x30] sm:$0xf]
      %v249 = vld [vmem:[%s235 + $0x34] sm:$0xf]
      %v250 = vld [vmem:[%s235 + $0x38] sm:$0xf]
      %v251 = vld [vmem:[%s235 + $0x3c] sm:$0xf]
      %v252 = vld [vmem:[#allocation2] sm:$0xff]
      %v253 = vld [vmem:[#allocation2 + $0x8] sm:$0xff]
      %v254 = vld [vmem:[%s216] sm:$0xf]
      %v255 = vld [vmem:[%s216 + $0x4] sm:$0xf]
      %v258 = vunpack.c.l.b16 %v254
      %v259 = vunpack.c.l.b16 %v255
      %v260 = vpack.c.b16 %v259, %v258
      %v278 = vunpack.c.l.b16 %v236
      %v279 = vunpack.c.l.b16 %v237
      %v280 = vunpack.c.l.b16 %v238
      %v281 = vunpack.c.l.b16 %v239
      %v282 = vunpack.c.l.b16 %v240
      %v283 = vunpack.c.l.b16 %v241
      %v284 = vunpack.c.l.b16 %v242
      %v285 = vunpack.c.l.b16 %v243
      %v286 = vunpack.c.l.b16 %v244
      %v287 = vunpack.c.l.b16 %v245
      %v288 = vunpack.c.l.b16 %v246
      %v289 = vunpack.c.l.b16 %v247
      %v290 = vunpack.c.l.b16 %v248
      %v291 = vunpack.c.l.b16 %v249
      %v292 = vunpack.c.l.b16 %v250
      %v293 = vunpack.c.l.b16 %v251
      %v294 = vpack.c.b16 %v279, %v278
      %v295 = vpack.c.b16 %v281, %v280
      %v296 = vpack.c.b16 %v283, %v282
      %v297 = vpack.c.b16 %v285, %v284
      %v298 = vpack.c.b16 %v287, %v286
      %v299 = vpack.c.b16 %v289, %v288
      %v300 = vpack.c.b16 %v291, %v290
      %v301 = vpack.c.b16 %v293, %v292
      %310 = vmatprep.subr.bf16.mxu0 0
      %311 = vmatpush1.bf16.msra.mxu0 %v294
      %312 = vmatprep.subr.bf16.mxu0 0
      %313 = vmatpush1.bf16.msra.mxu0 %v295
      %314 = vmatprep.subr.bf16.mxu0 0
      %315 = vmatpush1.bf16.msra.mxu0 %v296
      %316 = vmatprep.subr.bf16.mxu0 0
      %317 = vmatpush1.bf16.msra.mxu0 %v297
      %318 = vmatprep.subr.bf16.mxu0 0
      %319 = vmatpush1.bf16.msra.mxu0 %v298
      %320 = vmatprep.subr.bf16.mxu0 0
      %321 = vmatpush1.bf16.msra.mxu0 %v299
      %322 = vmatprep.subr.bf16.mxu0 0
      %323 = vmatpush1.bf16.msra.mxu0 %v300
      %324 = vmatprep.subr.bf16.mxu0 0
      %325 = vmatpush1.bf16.msra.mxu0 %v301
      %326 = vmatprep.subr.bf16.mxu0 0
      %327 = vmatpush1.bf16.msra.mxu0 0
      %328 = vmatprep.subr.bf16.mxu0 0
      %329 = vmatpush1.bf16.msra.mxu0 0
      %330 = vmatprep.subr.bf16.mxu0 0
      %331 = vmatpush1.bf16.msra.mxu0 0
      %332 = vmatprep.subr.bf16.mxu0 0
      %333 = vmatpush1.bf16.msra.mxu0 0
      %334 = vmatprep.subr.bf16.mxu0 0
      %335 = vmatpush1.bf16.msra.mxu0 0
      %336 = vmatprep.subr.bf16.mxu0 0
      %337 = vmatpush1.bf16.msra.mxu0 0
      %338 = vmatprep.subr.bf16.mxu0 0
      %339 = vmatpush1.bf16.msra.mxu0 0
      %340 = vmatprep.subr.bf16.mxu0 0
      %341 = vmatpush1.bf16.msra.mxu0 0
      %342 = vmatprep.mubr.bf16.mxu0 0
      %343 = vmatmul.mubr.bf16.gmra.mrb[0].mxu0 %v260
      %v344 = vpop.f32.mrb[0].mxu0
      %v345 = vadd.f32 0.0, %v344
      %v346 = vpop.f32.mrb[0].mxu0
      %v347 = vpop.f32.mrb[0].mxu0
      %v348 = vadd.f32 0.0, %v347
      %v349 = vpop.f32.mrb[0].mxu0
      %350 = vdwg.mxu0
      %v351 = vadd.f32 %v252, %v345
      %v352 = vadd.f32 %v253, %v348
      %353 = vst [vmem:[#allocation2] sm:$0xff] %v351
      %354 = vst [vmem:[#allocation2 + $0x8] sm:$0xff] %v352
      // Predicated region
      $region41: #{basic_block_forward.4} parent=35 // pred_check
        %p355 = pneg %p225
      $region42: #{basic_block_forward.4} parent=35 // pred_check_branch
        %357 = sbr.rel (%p355) target = $region44
      $region43: #{basic_block_forward.4} parent=35 // pred_region
        %v358 = vld [vmem:[#allocation2] sm:$0xff]
        %v359 = vld [vmem:[#allocation2 + $0x8] sm:$0xff]
        %v360 = vld [vmem:[%s2] sm:$0x1]
        %v362 = vlaneseq
        %v363 = vshrl.u32 %v362, 7
        %v364 = vsub.s32 0, %v363
        %v365 = vrot.slane %v360, %v364
        %v367 = vmul.f32 %v358, %v365
        %v368 = vmul.f32 %v359, %v365
        %v369 = vld [vmem:[%s3] sm:$0x1]
        %v371 = vlaneseq
        %v372 = vshrl.u32 %v371, 7
        %v373 = vsub.s32 0, %v372
        %v374 = vrot.slane %v369, %v373
        %v376 = vadd.f32 %v367, %v374
        %v377 = vadd.f32 %v368, %v374
        %v378 = vpack.c.bf16 %v377, %v376
        %v380 = vunpack.c.l.b16 %v378
        %v381 = vunpack.c.h.b16 %v378
        %v382 = vpack.c.b16 %v380, %v380
        %v383 = vpack.c.b16 %v381, %v381
        %386 = vst [vmem:[%s222] sm:$0xf] %v382
        %387 = vst [vmem:[%s222 + $0x4] sm:$0xf] %v383
      $region44: #{basic_block_forward.4} parent=35 // pred_fallthru
        _
      %s388 = smul.u32 2, %s19
      %p389 = scmp.lt.s32.totalorder %s388, 3
      %s390 = scalar_select %p389, %s388, 3
      %s391 = smul.addr %s390, 4
      %s392 = scalar_lea.vmem %s4, %s391
      // Predicated region
      $region45: #{basic_block_forward.4} parent=35 // pred_check
        %p393 = pneg %p136
      $region46: #{basic_block_forward.4} parent=35 // pred_check_branch
        %395 = sbr.rel (%p393) target = $region48
      $region47: #{basic_block_forward.4} parent=35 // pred_region
        %s396 = smul.u32 2, %s19
      $region48: #{basic_block_forward.4} parent=35 // pred_fallthru
        _
    $region36: #{basic_block_forward.4} parent=5 // pred_fallthru
      _
    %p397 = scmp.le.s32.totalorder 2, %s10
    // Predicated region
    $region49: #{basic_block_forward.4} parent=5 // pred_check
      %p398 = pneg %p397
    $region50: #{basic_block_forward.4} parent=5 // pred_check_branch
      %400 = sbr.rel (%p398) target = $region52
    $region51: #{basic_block_forward.4} parent=5 // pred_region
      %s401 = ssub.s32 %s10, 2
      // Predicated region
      $region53: #{basic_block_forward.4} parent=51 // pred_check
        %p402 = pneg %p142
      $region54: #{basic_block_forward.4} parent=51 // pred_check_branch
        %404 = sbr.rel (%p402) target = $region56
      $region55: #{basic_block_forward.4} parent=51 // pred_region
        %s405 = smul.u32 2, %s21
        %p406 = scmp.lt.s32.totalorder %s405, 3
        %s407 = scalar_select %p406, %s405, 3
        %s408 = smul.addr %s407, 4
        %s409 = scalar_lea.vmem %s4, %s408
      $region56: #{basic_block_forward.4} parent=51 // pred_fallthru
        _
    $region52: #{basic_block_forward.4} parent=5 // pred_fallthru
      _
  $region6: #{basic_block_forward.4} parent=0 // loop_footer
    %s14 = sadd.s32 1, %s10
  $region7: #{basic_block_forward.4} parent=0 // loop_footer_branch
    %9 = sbr.rel target = $region3
  $region8: #{basic_block_forward.4} parent=0 // loop_exit
    _

// kernel: basic_block_forward.5
$region0: #{basic_block_forward.5}
  #allocation0 [shape = 'u32[]', space=smem, size = 0x4, offset = 0x4, fixed_abs, tag = 'smem constant byte address 0x4 - core index']
  #allocation1 [shape = 'u32[144,128]{1,0:T(1,128)}', space=vmem, size = 0x12000, scoped, tag = 'internal scratch']
  #allocation2 [shape = 'f32[16,128]{1,0:T(8,128)}', space=vmem, size = 0x2000, scoped, tag = 'scratch operand']
  %s0 = inlined_call_operand.vmem [shape: bf16[32,640], index: 0, kind: input, shape index: {}]
  %s1 = inlined_call_operand.vmem [shape: bf16[640,128], index: 1, kind: input, shape index: {}]
  %s2 = inlined_call_operand.vmem [shape: f32[1,128], index: 2, kind: input, shape index: {}]
  %s3 = inlined_call_operand.vmem [shape: f32[1,128], index: 3, kind: input, shape index: {}]
  %s4 = inlined_call_operand.vmem [shape: bf16[32,128], index: 4, kind: input, shape index: {}]
  %s5 = inlined_call_operand.vmem [shape: bf16[32,128], index: 5, kind: output, shape index: {}]
  %s6 = sld [smem:[#allocation0]]
  $region61: #{basic_block_forward.5} parent=0
    _
  %s8 = ssub.s32 1, %s6
  %s9 = scalar_select 0, %s8, %s6
  loop: start=0, step=1, limit=4
  $region2: #{basic_block_forward.5} parent=0 // loop_pre_header
    _
  $region3: #{basic_block_forward.5} parent=0 // loop_header
    %s11 = sphi 0, %s15
    %p12 = scmp.ge.s32.totalorder %s11, 4
    %s18 = sphi 0, %s30
    %s19 = sphi 0, %s26
    %s20 = sphi 0, %s18
    %s21 = sphi 0, %s19
    %s22 = sphi 0, %s20
    %s23 = sphi 0, %s21
    %s35 = sphi 0, %s37
    %s38 = sphi 0, %s35
    %s39 = sphi 0, %s38
    %s55 = sphi 0, %s39
    %s59 = sphi 0, %s59
    %s61 = sphi 0, %s59
    %s62 = sphi 0, %s61
    %s76 = sphi 0, %s62
    %s80 = sphi 0, %s80
    %s82 = sphi 0, %s80
    %s83 = sphi 0, %s82
    %s97 = sphi 0, %s83
    %s101 = sphi 0, %s101
    %s103 = sphi 0, %s101
    %s104 = sphi 0, %s103
    %s118 = sphi 0, %s104
    %s124 = sphi 0, %s126
    %s127 = sphi 0, %s124
    %s128 = sphi 0, %s127
    %s144 = sphi 0, %s128
    %s150 = sphi 0, %s152
    %s153 = sphi 0, %s150
    %s154 = sphi 0, %s153
    %s170 = sphi 0, %s154
  $region4: #{basic_block_forward.5} parent=0 // loop_header_branch
    %14 = sbr.rel (%p12) target = $region8
  $region5: #{basic_block_forward.5} parent=0 // loop_body
    %s16 = ssub.s32 %s11, 1
    %s17 = ssub.s32 %s11, 2
    %s24 = sadd.s32 1, %s19
    %p25 = scmp.ge.s32.totalorder %s24, 1
    %s26 = scalar_select %p25, 0, %s24
    %s27 = sadd.s32 1, %s18
    %s28 = scalar_select %p25, %s27, %s18
    %p29 = scmp.ge.s32.totalorder %s28, 2
    %s30 = scalar_select %p29, 0, %s28
    %s31 = ssub.s32 %s18, %s30
    %s32 = ssub.s32 %s19, %s26
    %s33 = sor.u32 %s31, %s32
    %p34 = scmp.eq.s32.totalorder %s33, 0
    %s36 = sadd.s32 %s35, 1
    %s37 = scalar_select %p34, %s35, %s36
    %p40 = pneg %p34
    %p41 = scmp.eq.s32.totalorder %s11, 1
    %p42 = por %p40, %p41
    %p43 = scmp.ne.s32.totalorder %s35, %s38
    %p44 = scmp.eq.s32.totalorder %s11, 0
    %p45 = por %p43, %p44
    %p46 = scmp.ne.s32.totalorder %s35, %s38
    %p47 = scmp.eq.s32.totalorder %s16, 1
    %p48 = por %p46, %p47
    %p49 = scmp.ne.s32.totalorder %s38, %s39
    %p50 = scmp.eq.s32.totalorder %s16, 0
    %p51 = por %p49, %p50
    %p52 = scmp.ne.s32.totalorder %s38, %s39
    %p53 = scmp.eq.s32.totalorder %s17, 1
    %p54 = por %p52, %p53
    %p56 = scmp.ne.s32.totalorder %s39, %s55
    %p57 = scmp.eq.s32.totalorder %s17, 0
    %p58 = por %p56, %p57
    %s60 = sadd.s32 %s59, 1
    %p63 = scmp.eq.s32.totalorder %s11, 1
    %p64 = scmp.ne.s32.totalorder %s59, %s61
    %p65 = scmp.eq.s32.totalorder %s11, 0
    %p66 = por %p64, %p65
    %p67 = scmp.ne.s32.totalorder %s59, %s61
    %p68 = scmp.eq.s32.totalorder %s16, 1
    %p69 = por %p67, %p68
    %p70 = scmp.ne.s32.totalorder %s61, %s62
    %p71 = scmp.eq.s32.totalorder %s16, 0
    %p72 = por %p70, %p71
    %p73 = scmp.ne.s32.totalorder %s61, %s62
    %p74 = scmp.eq.s32.totalorder %s17, 1
    %p75 = por %p73, %p74
    %p77 = scmp.ne.s32.totalorder %s62, %s76
    %p78 = scmp.eq.s32.totalorder %s17, 0
    %p79 = por %p77, %p78
    %s81 = sadd.s32 %s80, 1
    %p84 = scmp.eq.s32.totalorder %s11, 1
    %p85 = scmp.ne.s32.totalorder %s80, %s82
    %p86 = scmp.eq.s32.totalorder %s11, 0
    %p87 = por %p85, %p86
    %p88 = scmp.ne.s32.totalorder %s80, %s82
    %p89 = scmp.eq.s32.totalorder %s16, 1
    %p90 = por %p88, %p89
    %p91 = scmp.ne.s32.totalorder %s82, %s83
    %p92 = scmp.eq.s32.totalorder %s16, 0
    %p93 = por %p91, %p92
    %p94 = scmp.ne.s32.totalorder %s82, %s83
    %p95 = scmp.eq.s32.totalorder %s17, 1
    %p96 = por %p94, %p95
    %p98 = scmp.ne.s32.totalorder %s83, %s97
    %p99 = scmp.eq.s32.totalorder %s17, 0
    %p100 = por %p98, %p99
    %s102 = sadd.s32 %s101, 1
    %p105 = scmp.eq.s32.totalorder %s11, 1
    %p106 = scmp.ne.s32.totalorder %s101, %s103
    %p107 = scmp.eq.s32.totalorder %s11, 0
    %p108 = por %p106, %p107
    %p109 = scmp.ne.s32.totalorder %s101, %s103
    %p110 = scmp.eq.s32.totalorder %s16, 1
    %p111 = por %p109, %p110
    %p112 = scmp.ne.s32.totalorder %s103, %s104
    %p113 = scmp.eq.s32.totalorder %s16, 0
    %p114 = por %p112, %p113
    %p115 = scmp.ne.s32.totalorder %s103, %s104
    %p116 = scmp.eq.s32.totalorder %s17, 1
    %p117 = por %p115, %p116
    %p119 = scmp.ne.s32.totalorder %s104, %s118
    %p120 = scmp.eq.s32.totalorder %s17, 0
    %p121 = por %p119, %p120
    %s122 = ssub.s32 %s18, %s30
    %p123 = scmp.eq.s32.totalorder %s122, 0
    %s125 = sadd.s32 %s124, 1
    %s126 = scalar_select %p123, %s124, %s125
    %p129 = pneg %p123
    %p130 = scmp.eq.s32.totalorder %s11, 1
    %p131 = por %p129, %p130
    %p132 = scmp.ne.s32.totalorder %s124, %s127
    %p133 = scmp.eq.s32.totalorder %s11, 0
    %p134 = por %p132, %p133
    %p135 = scmp.ne.s32.totalorder %s124, %s127
    %p136 = scmp.eq.s32.totalorder %s16, 1
    %p137 = por %p135, %p136
    %p138 = scmp.ne.s32.totalorder %s127, %s128
    %p139 = scmp.eq.s32.totalorder %s16, 0
    %p140 = por %p138, %p139
    %p141 = scmp.ne.s32.totalorder %s127, %s128
    %p142 = scmp.eq.s32.totalorder %s17, 1
    %p143 = por %p141, %p142
    %p145 = scmp.ne.s32.totalorder %s128, %s144
    %p146 = scmp.eq.s32.totalorder %s17, 0
    %p147 = por %p145, %p146
    %s148 = ssub.s32 %s18, %s30
    %p149 = scmp.eq.s32.totalorder %s148, 0
    %s151 = sadd.s32 %s150, 1
    %s152 = scalar_select %p149, %s150, %s151
    %p155 = pneg %p149
    %p156 = scmp.eq.s32.totalorder %s11, 1
    %p157 = por %p155, %p156
    %p158 = scmp.ne.s32.totalorder %s150, %s153
    %p159 = scmp.eq.s32.totalorder %s11, 0
    %p160 = por %p158, %p159
    %p161 = scmp.ne.s32.totalorder %s150, %s153
    %p162 = scmp.eq.s32.totalorder %s16, 1
    %p163 = por %p161, %p162
    %p164 = scmp.ne.s32.totalorder %s153, %s154
    %p165 = scmp.eq.s32.totalorder %s16, 0
    %p166 = por %p164, %p165
    %p167 = scmp.ne.s32.totalorder %s153, %s154
    %p168 = scmp.eq.s32.totalorder %s17, 1
    %p169 = por %p167, %p168
    %p171 = scmp.ne.s32.totalorder %s154, %s170
    %p172 = scmp.eq.s32.totalorder %s17, 0
    %p173 = por %p171, %p172
    %p174 = scmp.le.s32.totalorder 1, %s11
    %p175 = scmp.lt.s32.totalorder %s11, 3
    %p176 = pnand %p174, %p175
    %p177 = pneg %p176
    // Predicated region
    $region9: #{basic_block_forward.5} parent=5 // pred_check
      _
    $region10: #{basic_block_forward.5} parent=5 // pred_check_branch
      %179 = sbr.rel (%p176) target = $region12
    $region11: #{basic_block_forward.5} parent=5 // pred_region
      %s180 = ssub.s32 %s11, 1
      // Predicated region
      $region13: #{basic_block_forward.5} parent=11 // pred_check
        %p181 = pneg %p72
      $region14: #{basic_block_forward.5} parent=11 // pred_check_branch
        %183 = sbr.rel (%p181) target = $region16
      $region15: #{basic_block_forward.5} parent=11 // pred_region
        _
      $region16: #{basic_block_forward.5} parent=11 // pred_fallthru
        _
      // Predicated region
      $region17: #{basic_block_forward.5} parent=11 // pred_check
        %p184 = pneg %p93
      $region18: #{basic_block_forward.5} parent=11 // pred_check_branch
        %186 = sbr.rel (%p184) target = $region20
      $region19: #{basic_block_forward.5} parent=11 // pred_region
        _
      $region20: #{basic_block_forward.5} parent=11 // pred_fallthru
        _
      // Predicated region
      $region21: #{basic_block_forward.5} parent=11 // pred_check
        %p187 = pneg %p114
      $region22: #{basic_block_forward.5} parent=11 // pred_check_branch
        %189 = sbr.rel (%p187) target = $region24
      $region23: #{basic_block_forward.5} parent=11 // pred_region
        _
      $region24: #{basic_block_forward.5} parent=11 // pred_fallthru
        _
    $region12: #{basic_block_forward.5} parent=5 // pred_fallthru
      _
    %p190 = scmp.lt.s32.totalorder %s11, 2
    // Predicated region
    $region25: #{basic_block_forward.5} parent=5 // pred_check
      %p191 = pneg %p190
    $region26: #{basic_block_forward.5} parent=5 // pred_check_branch
      %193 = sbr.rel (%p191) target = $region28
    $region27: #{basic_block_forward.5} parent=5 // pred_region
      // Predicated region
      $region29: #{basic_block_forward.5} parent=27 // pred_check
        %p194 = pneg %p45
      $region30: #{basic_block_forward.5} parent=27 // pred_check_branch
        %196 = sbr.rel (%p194) target = $region32
      $region31: #{basic_block_forward.5} parent=27 // pred_region
        %s197 = smul.u32 2, %s18
        %s198 = smul.u32 5, %s19
        %p199 = scmp.lt.s32.totalorder %s197, 3
        %s200 = scalar_select %p199, %s197, 3
        %p201 = scmp.lt.s32.totalorder %s198, 4
        %s202 = scalar_select %p201, %s198, 4
        %s203 = smul.addr %s200, 5
        %s204 = sadd.s32 %s202, %s203
        %s205 = smul.addr %s204, 4
        %s206 = scalar_lea.vmem %s0, %s205
        %s207 = smul.u32 2, %s18
        %s208 = smul.u32 5, %s19
      $region32: #{basic_block_forward.5} parent=27 // pred_fallthru
        _
      // Predicated region
      $region33: #{basic_block_forward.5} parent=27 // pred_check
        %p209 = pneg %p134
      $region34: #{basic_block_forward.5} parent=27 // pred_check_branch
        %211 = sbr.rel (%p209) target = $region36
      $region35: #{basic_block_forward.5} parent=27 // pred_region
        %s212 = smul.u32 2, %s18
        %p213 = scmp.lt.s32.totalorder %s212, 3
        %s214 = scalar_select %p213, %s212, 3
        %s215 = smul.addr %s214, 4
        %s216 = scalar_lea.vmem %s4, %s215
        %s217 = smul.u32 2, %s18
      $region36: #{basic_block_forward.5} parent=27 // pred_fallthru
        _
    $region28: #{basic_block_forward.5} parent=5 // pred_fallthru
      _
    %p218 = scmp.le.s32.totalorder 1, %s11
    %p219 = scmp.lt.s32.totalorder %s11, 3
    %p220 = pnand %p218, %p219
    %p221 = pneg %p220
    // Predicated region
    $region37: #{basic_block_forward.5} parent=5 // pred_check
      _
    $region38: #{basic_block_forward.5} parent=5 // pred_check_branch
      %223 = sbr.rel (%p220) target = $region40
    $region39: #{basic_block_forward.5} parent=5 // pred_region
      %s224 = ssub.s32 %s11, 1
      %s225 = smul.u32 2, %s20
      %s226 = smul.u32 5, %s21
      %p227 = scmp.lt.s32.totalorder %s225, 3
      %s228 = scalar_select %p227, %s225, 3
      %p229 = scmp.lt.s32.totalorder %s226, 4
      %s230 = scalar_select %p229, %s226, 4
      %s231 = smul.addr %s228, 5
      %s232 = sadd.s32 %s230, %s231
      %s233 = smul.addr %s232, 4
      %s234 = scalar_lea.vmem %s0, %s233
      %p235 = pneg %p51
      %p236 = pneg %p48
      %p237 = pneg %p72
      %p238 = pneg %p69
      %p239 = pneg %p93
      %p240 = pneg %p90
      %p241 = pneg %p114
      %p242 = pneg %p111
      %s243 = smul.u32 2, %s20
      %p244 = scmp.lt.s32.totalorder %s243, 3
      %s245 = scalar_select %p244, %s243, 3
      %s246 = smul.addr %s245, 4
      %s247 = scalar_lea.vmem %s4, %s246
      %p248 = pneg %p140
      %p249 = pneg %p137
      %p250 = pneg %p166
      %p251 = pneg %p163
      %s252 = smul.u32 2, %s20
      %p253 = scmp.lt.s32.totalorder %s252, 3
      %s254 = scalar_select %p253, %s252, 3
      %s255 = smul.addr %s254, 4
      %s256 = scalar_lea.vmem %s5, %s255
      %s257 = smul.u32 2, %s20
      %s258 = smul.u32 5, %s21
      %p259 = scmp.lt.s32.totalorder %s257, 3
      %s260 = scalar_select %p259, %s257, 3
      %p261 = scmp.lt.s32.totalorder %s258, 4
      %s262 = scalar_select %p261, %s258, 4
      %s263 = smul.addr %s260, 5
      %s264 = sadd.s32 %s262, %s263
      %s265 = smul.addr %s264, 4
      %s266 = scalar_lea.vmem %s0, %s265
      %s267 = smul.u32 2, %s20
      %s268 = smul.u32 5, %s21
      %s269 = smul.u32 2, %s20
      %p270 = scmp.lt.s32.totalorder %s269, 3
      %s271 = scalar_select %p270, %s269, 3
      %s272 = smul.addr %s271, 4
      %s273 = scalar_lea.vmem %s4, %s272
      %s274 = smul.u32 2, %s20
      %s275 = smul.u32 2, %s20
      %p276 = scmp.lt.s32.totalorder %s275, 3
      %s277 = scalar_select %p276, %s275, 3
      %s278 = smul.addr %s277, 4
      %s279 = scalar_lea.vmem %s5, %s278
      %s280 = smul.u32 2, %s20
      %p282 = scmp.eq.s32.totalorder %s21, 0
      // Predicated region
      $region41: #{basic_block_forward.5} parent=39 // pred_check
        %p283 = pneg %p282
      $region42: #{basic_block_forward.5} parent=39 // pred_check_branch
        %285 = sbr.rel (%p283) target = $region44
      $region43: #{basic_block_forward.5} parent=39 // pred_region
        %286 = vst [vmem:[#allocation2] sm:$0xff] 0.0
        %287 = vst [vmem:[#allocation2 + $0x8] sm:$0xff] 0.0
      $region44: #{basic_block_forward.5} parent=39 // pred_fallthru
        _
      %s288 = smul.u32 %s21, 640
      %s289 = sshra.s32 %s288, 3
      %s290 = sand.u32 %s288, 7
      %s291 = smul.addr %s289, 4
      %s292 = scalar_lea.vmem %s1, %s291
      %v293 = vld [vmem:[%s292] sm:$0xf]
      %v294 = vld [vmem:[%s292 + $0x4] sm:$0xf]
      %v295 = vld [vmem:[%s292 + $0x8] sm:$0xf]
      %v296 = vld [vmem:[%s292 + $0xc] sm:$0xf]
      %v297 = vld [vmem:[%s292 + $0x10] sm:$0xf]
      %v298 = vld [vmem:[%s292 + $0x14] sm:$0xf]
      %v299 = vld [vmem:[%s292 + $0x18] sm:$0xf]
      %v300 = vld [vmem:[%s292 + $0x1c] sm:$0xf]
      %v301 = vld [vmem:[%s292 + $0x20] sm:$0xf]
      %v302 = vld [vmem:[%s292 + $0x24] sm:$0xf]
      %v303 = vld [vmem:[%s292 + $0x28] sm:$0xf]
      %v304 = vld [vmem:[%s292 + $0x2c] sm:$0xf]
      %v305 = vld [vmem:[%s292 + $0x30] sm:$0xf]
      %v306 = vld [vmem:[%s292 + $0x34] sm:$0xf]
      %v307 = vld [vmem:[%s292 + $0x38] sm:$0xf]
      %v308 = vld [vmem:[%s292 + $0x3c] sm:$0xf]
      %v309 = vld [vmem:[%s292 + $0x40] sm:$0xf]
      %v310 = vld [vmem:[%s292 + $0x44] sm:$0xf]
      %v311 = vld [vmem:[%s292 + $0x48] sm:$0xf]
      %v312 = vld [vmem:[%s292 + $0x4c] sm:$0xf]
      %v313 = vld [vmem:[%s292 + $0x50] sm:$0xf]
      %v314 = vld [vmem:[%s292 + $0x54] sm:$0xf]
      %v315 = vld [vmem:[%s292 + $0x58] sm:$0xf]
      %v316 = vld [vmem:[%s292 + $0x5c] sm:$0xf]
      %v317 = vld [vmem:[%s292 + $0x60] sm:$0xf]
      %v318 = vld [vmem:[%s292 + $0x64] sm:$0xf]
      %v319 = vld [vmem:[%s292 + $0x68] sm:$0xf]
      %v320 = vld [vmem:[%s292 + $0x6c] sm:$0xf]
      %v321 = vld [vmem:[%s292 + $0x70] sm:$0xf]
      %v322 = vld [vmem:[%s292 + $0x74] sm:$0xf]
      %v323 = vld [vmem:[%s292 + $0x78] sm:$0xf]
      %v324 = vld [vmem:[%s292 + $0x7c] sm:$0xf]
      %v325 = vld [vmem:[%s292 + $0x80] sm:$0xf]
      %v326 = vld [vmem:[%s292 + $0x84] sm:$0xf]
      %v327 = vld [vmem:[%s292 + $0x88] sm:$0xf]
      %v328 = vld [vmem:[%s292 + $0x8c] sm:$0xf]
      %v329 = vld [vmem:[%s292 + $0x90] sm:$0xf]
      %v330 = vld [vmem:[%s292 + $0x94] sm:$0xf]
      %v331 = vld [vmem:[%s292 + $0x98] sm:$0xf]
      %v332 = vld [vmem:[%s292 + $0x9c] sm:$0xf]
      %v333 = vld [vmem:[%s292 + $0xa0] sm:$0xf]
      %v334 = vld [vmem:[%s292 + $0xa4] sm:$0xf]
      %v335 = vld [vmem:[%s292 + $0xa8] sm:$0xf]
      %v336 = vld [vmem:[%s292 + $0xac] sm:$0xf]
      %v337 = vld [vmem:[%s292 + $0xb0] sm:$0xf]
      %v338 = vld [vmem:[%s292 + $0xb4] sm:$0xf]
      %v339 = vld [vmem:[%s292 + $0xb8] sm:$0xf]
      %v340 = vld [vmem:[%s292 + $0xbc] sm:$0xf]
      %v341 = vld [vmem:[%s292 + $0xc0] sm:$0xf]
      %v342 = vld [vmem:[%s292 + $0xc4] sm:$0xf]
      %v343 = vld [vmem:[%s292 + $0xc8] sm:$0xf]
      %v344 = vld [vmem:[%s292 + $0xcc] sm:$0xf]
      %v345 = vld [vmem:[%s292 + $0xd0] sm:$0xf]
      %v346 = vld [vmem:[%s292 + $0xd4] sm:$0xf]
      %v347 = vld [vmem:[%s292 + $0xd8] sm:$0xf]
      %v348 = vld [vmem:[%s292 + $0xdc] sm:$0xf]
      %v349 = vld [vmem:[%s292 + $0xe0] sm:$0xf]
      %v350 = vld [vmem:[%s292 + $0xe4] sm:$0xf]
      %v351 = vld [vmem:[%s292 + $0xe8] sm:$0xf]
      %v352 = vld [vmem:[%s292 + $0xec] sm:$0xf]
      %v353 = vld [vmem:[%s292 + $0xf0] sm:$0xf]
      %v354 = vld [vmem:[%s292 + $0xf4] sm:$0xf]
      %v355 = vld [vmem:[%s292 + $0xf8] sm:$0xf]
      %v356 = vld [vmem:[%s292 + $0xfc] sm:$0xf]
      %v357 = vld [vmem:[%s292 + $0x100] sm:$0xf]
      %v358 = vld [vmem:[%s292 + $0x104] sm:$0xf]
      %v359 = vld [vmem:[%s292 + $0x108] sm:$0xf]
      %v360 = vld [vmem:[%s292 + $0x10c] sm:$0xf]
      %v361 = vld [vmem:[%s292 + $0x110] sm:$0xf]
      %v362 = vld [vmem:[%s292 + $0x114] sm:$0xf]
      %v363 = vld [vmem:[%s292 + $0x118] sm:$0xf]
      %v364 = vld [vmem:[%s292 + $0x11c] sm:$0xf]
      %v365 = vld [vmem:[%s292 + $0x120] sm:$0xf]
      %v366 = vld [vmem:[%s292 + $0x124] sm:$0xf]
      %v367 = vld [vmem:[%s292 + $0x128] sm:$0xf]
      %v368 = vld [vmem:[%s292 + $0x12c] sm:$0xf]
      %v369 = vld [vmem:[%s292 + $0x130] sm:$0xf]
      %v370 = vld [vmem:[%s292 + $0x134] sm:$0xf]
      %v371 = vld [vmem:[%s292 + $0x138] sm:$0xf]
      %v372 = vld [vmem:[%s292 + $0x13c] sm:$0xf]
      %v373 = vld [vmem:[#allocation2] sm:$0xff]
      %v374 = vld [vmem:[#allocation2 + $0x8] sm:$0xff]
      %v375 = vld [vmem:[%s266] sm:$0xff]
      %v376 = vld [vmem:[%s266 + $0x8] sm:$0xff]
      %v377 = vld [vmem:[%s266 + $0x10] sm:$0xf]
      %v378 = vld [vmem:[%s266 + $0x14] sm:$0xff]
      %v379 = vld [vmem:[%s266 + $0x1c] sm:$0xff]
      %v380 = vld [vmem:[%s266 + $0x24] sm:$0xf]
      %v387 = vunpack.c.l.b16 %v375
      %v388 = vunpack.c.h.b16 %v375
      %v389 = vunpack.c.l.b16 %v376
      %v390 = vunpack.c.h.b16 %v376
      %v391 = vunpack.c.l.b16 %v377
      %v392 = vunpack.c.l.b16 %v378
      %v393 = vunpack.c.h.b16 %v378
      %v394 = vunpack.c.l.b16 %v379
      %v395 = vunpack.c.h.b16 %v379
      %v396 = vunpack.c.l.b16 %v380
      %v397 = vpack.c.b16 %v392, %v387
      %v398 = vpack.c.b16 %v393, %v388
      %v399 = vpack.c.b16 %v394, %v389
      %v400 = vpack.c.b16 %v395, %v390
      %v401 = vpack.c.b16 %v396, %v391
      %v487 = vunpack.c.l.b16 %v293
      %v488 = vunpack.c.l.b16 %v294
      %v489 = vunpack.c.l.b16 %v295
      %v490 = vunpack.c.l.b16 %v296
      %v491 = vunpack.c.l.b16 %v297
      %v492 = vunpack.c.l.b16 %v298
      %v493 = vunpack.c.l.b16 %v299
      %v494 = vunpack.c.l.b16 %v300
      %v495 = vunpack.c.l.b16 %v301
      %v496 = vunpack.c.l.b16 %v302
      %v497 = vunpack.c.l.b16 %v303
      %v498 = vunpack.c.l.b16 %v304
      %v499 = vunpack.c.l.b16 %v305
      %v500 = vunpack.c.l.b16 %v306
      %v501 = vunpack.c.l.b16 %v307
      %v502 = vunpack.c.l.b16 %v308
      %v503 = vunpack.c.l.b16 %v309
      %v504 = vunpack.c.l.b16 %v310
      %v505 = vunpack.c.l.b16 %v311
      %v506 = vunpack.c.l.b16 %v312
      %v507 = vunpack.c.l.b16 %v313
      %v508 = vunpack.c.l.b16 %v314
      %v509 = vunpack.c.l.b16 %v315
      %v510 = vunpack.c.l.b16 %v316
      %v511 = vunpack.c.l.b16 %v317
      %v512 = vunpack.c.l.b16 %v318
      %v513 = vunpack.c.l.b16 %v319
      %v514 = vunpack.c.l.b16 %v320
      %v515 = vunpack.c.l.b16 %v321
      %v516 = vunpack.c.l.b16 %v322
      %v517 = vunpack.c.l.b16 %v323
      %v518 = vunpack.c.l.b16 %v324
      %v519 = vunpack.c.l.b16 %v325
      %v520 = vunpack.c.l.b16 %v326
      %v521 = vunpack.c.l.b16 %v327
      %v522 = vunpack.c.l.b16 %v328
      %v523 = vunpack.c.l.b16 %v329
      %v524 = vunpack.c.l.b16 %v330
      %v525 = vunpack.c.l.b16 %v331
      %v526 = vunpack.c.l.b16 %v332
      %v527 = vunpack.c.l.b16 %v333
      %v528 = vunpack.c.l.b16 %v334
      %v529 = vunpack.c.l.b16 %v335
      %v530 = vunpack.c.l.b16 %v336
      %v531 = vunpack.c.l.b16 %v337
      %v532 = vunpack.c.l.b16 %v338
      %v533 = vunpack.c.l.b16 %v339
      %v534 = vunpack.c.l.b16 %v340
      %v535 = vunpack.c.l.b16 %v341
      %v536 = vunpack.c.l.b16 %v342
      %v537 = vunpack.c.l.b16 %v343
      %v538 = vunpack.c.l.b16 %v344
      %v539 = vunpack.c.l.b16 %v345
      %v540 = vunpack.c.l.b16 %v346
      %v541 = vunpack.c.l.b16 %v347
      %v542 = vunpack.c.l.b16 %v348
      %v543 = vunpack.c.l.b16 %v349
      %v544 = vunpack.c.l.b16 %v350
      %v545 = vunpack.c.l.b16 %v351
      %v546 = vunpack.c.l.b16 %v352
      %v547 = vunpack.c.l.b16 %v353
      %v548 = vunpack.c.l.b16 %v354
      %v549 = vunpack.c.l.b16 %v355
      %v550 = vunpack.c.l.b16 %v356
      %v551 = vunpack.c.l.b16 %v357
      %v552 = vunpack.c.l.b16 %v358
      %v553 = vunpack.c.l.b16 %v359
      %v554 = vunpack.c.l.b16 %v360
      %v555 = vunpack.c.l.b16 %v361
      %v556 = vunpack.c.l.b16 %v362
      %v557 = vunpack.c.l.b16 %v363
      %v558 = vunpack.c.l.b16 %v364
      %v559 = vunpack.c.l.b16 %v365
      %v560 = vunpack.c.l.b16 %v366
      %v561 = vunpack.c.l.b16 %v367
      %v562 = vunpack.c.l.b16 %v368
      %v563 = vunpack.c.l.b16 %v369
      %v564 = vunpack.c.l.b16 %v370
      %v565 = vunpack.c.l.b16 %v371
      %v566 = vunpack.c.l.b16 %v372
      %v567 = vpack.c.b16 %v488, %v487
      %v568 = vpack.c.b16 %v490, %v489
      %v569 = vpack.c.b16 %v492, %v491
      %v570 = vpack.c.b16 %v494, %v493
      %v571 = vpack.c.b16 %v496, %v495
      %v572 = vpack.c.b16 %v498, %v497
      %v573 = vpack.c.b16 %v500, %v499
      %v574 = vpack.c.b16 %v502, %v501
      %v575 = vpack.c.b16 %v504, %v503
      %v576 = vpack.c.b16 %v506, %v505
      %v577 = vpack.c.b16 %v508, %v507
      %v578 = vpack.c.b16 %v510, %v509
      %v579 = vpack.c.b16 %v512, %v511
      %v580 = vpack.c.b16 %v514, %v513
      %v581 = vpack.c.b16 %v516, %v515
      %v582 = vpack.c.b16 %v518, %v517
      %v583 = vpack.c.b16 %v520, %v519
      %v584 = vpack.c.b16 %v522, %v521
      %v585 = vpack.c.b16 %v524, %v523
      %v586 = vpack.c.b16 %v526, %v525
      %v587 = vpack.c.b16 %v528, %v527
      %v588 = vpack.c.b16 %v530, %v529
      %v589 = vpack.c.b16 %v532, %v531
      %v590 = vpack.c.b16 %v534, %v533
      %v591 = vpack.c.b16 %v536, %v535
      %v592 = vpack.c.b16 %v538, %v537
      %v593 = vpack.c.b16 %v540, %v539
      %v594 = vpack.c.b16 %v542, %v541
      %v595 = vpack.c.b16 %v544, %v543
      %v596 = vpack.c.b16 %v546, %v545
      %v597 = vpack.c.b16 %v548, %v547
      %v598 = vpack.c.b16 %v550, %v549
      %v599 = vpack.c.b16 %v552, %v551
      %v600 = vpack.c.b16 %v554, %v553
      %v601 = vpack.c.b16 %v556, %v555
      %v602 = vpack.c.b16 %v558, %v557
      %v603 = vpack.c.b16 %v560, %v559
      %v604 = vpack.c.b16 %v562, %v561
      %v605 = vpack.c.b16 %v564, %v563
      %v606 = vpack.c.b16 %v566, %v565
      %647 = vmatprep.subr.bf16.mxu0 0
      %648 = vmatpush1.bf16.msra.mxu0 %v567
      %649 = vmatprep.subr.bf16.mxu0 0
      %650 = vmatpush1.bf16.msra.mxu0 %v568
      %651 = vmatprep.subr.bf16.mxu0 0
      %652 = vmatpush1.bf16.msra.mxu0 %v569
      %653 = vmatprep.subr.bf16.mxu0 0
      %654 = vmatpush1.bf16.msra.mxu0 %v570
      %655 = vmatprep.subr.bf16.mxu0 0
      %656 = vmatpush1.bf16.msra.mxu0 %v571
      %657 = vmatprep.subr.bf16.mxu0 0
      %658 = vmatpush1.bf16.msra.mxu0 %v572
      %659 = vmatprep.subr.bf16.mxu0 0
      %660 = vmatpush1.bf16.msra.mxu0 %v573
      %661 = vmatprep.subr.bf16.mxu0 0
      %662 = vmatpush1.bf16.msra.mxu0 %v574
      %663 = vmatprep.subr.bf16.mxu0 0
      %664 = vmatpush1.bf16.msra.mxu0 %v575
      %665 = vmatprep.subr.bf16.mxu0 0
      %666 = vmatpush1.bf16.msra.mxu0 %v576
      %667 = vmatprep.subr.bf16.mxu0 0
      %668 = vmatpush1.bf16.msra.mxu0 %v577
      %669 = vmatprep.subr.bf16.mxu0 0
      %670 = vmatpush1.bf16.msra.mxu0 %v578
      %671 = vmatprep.subr.bf16.mxu0 0
      %672 = vmatpush1.bf16.msra.mxu0 %v579
      %673 = vmatprep.subr.bf16.mxu0 0
      %674 = vmatpush1.bf16.msra.mxu0 %v580
      %675 = vmatprep.subr.bf16.mxu0 0
      %676 = vmatpush1.bf16.msra.mxu0 %v581
      %677 = vmatprep.subr.bf16.mxu0 0
      %678 = vmatpush1.bf16.msra.mxu0 %v582
      %679 = vmatprep.mubr.bf16.mxu0 %v398
      %680 = vmatmul.mubr.bf16.gmra.mrb[0].mxu0 %v397
      %v681 = vpop.f32.mrb[0].mxu0
      %v682 = vadd.f32 0.0, %v681
      %v683 = vpop.f32.mrb[0].mxu0
      %v684 = vpop.f32.mrb[0].mxu0
      %v685 = vadd.f32 0.0, %v684
      %v686 = vpop.f32.mrb[0].mxu0
      %687 = vdwg.mxu0
      %688 = vmatprep.subr.bf16.mxu0 0
      %689 = vmatpush1.bf16.msra.mxu0 %v583
      %690 = vmatprep.subr.bf16.mxu0 0
      %691 = vmatpush1.bf16.msra.mxu0 %v584
      %692 = vmatprep.subr.bf16.mxu0 0
      %693 = vmatpush1.bf16.msra.mxu0 %v585
      %694 = vmatprep.subr.bf16.mxu0 0
      %695 = vmatpush1.bf16.msra.mxu0 %v586
      %696 = vmatprep.subr.bf16.mxu0 0
      %697 = vmatpush1.bf16.msra.mxu0 %v587
      %698 = vmatprep.subr.bf16.mxu0 0
      %699 = vmatpush1.bf16.msra.mxu0 %v588
      %700 = vmatprep.subr.bf16.mxu0 0
      %701 = vmatpush1.bf16.msra.mxu0 %v589
      %702 = vmatprep.subr.bf16.mxu0 0
      %703 = vmatpush1.bf16.msra.mxu0 %v590
      %704 = vmatprep.subr.bf16.mxu0 0
      %705 = vmatpush1.bf16.msra.mxu0 %v591
      %706 = vmatprep.subr.bf16.mxu0 0
      %707 = vmatpush1.bf16.msra.mxu0 %v592
      %708 = vmatprep.subr.bf16.mxu0 0
      %709 = vmatpush1.bf16.msra.mxu0 %v593
      %710 = vmatprep.subr.bf16.mxu0 0
      %711 = vmatpush1.bf16.msra.mxu0 %v594
      %712 = vmatprep.subr.bf16.mxu0 0
      %713 = vmatpush1.bf16.msra.mxu0 %v595
      %714 = vmatprep.subr.bf16.mxu0 0
      %715 = vmatpush1.bf16.msra.mxu0 %v596
      %716 = vmatprep.subr.bf16.mxu0 0
      %717 = vmatpush1.bf16.msra.mxu0 %v597
      %718 = vmatprep.subr.bf16.mxu0 0
      %719 = vmatpush1.bf16.msra.mxu0 %v598
      %720 = vmatprep.mubr.bf16.mxu0 %v400
      %721 = vmatmul.mubr.bf16.gmra.mrb[0].mxu0 %v399
      %v722 = vpop.f32.mrb[0].mxu0
      %v723 = vadd.f32 %v682, %v722
      %v724 = vpop.f32.mrb[0].mxu0
      %v725 = vpop.f32.mrb[0].mxu0
      %v726 = vadd.f32 %v685, %v725
      %v727 = vpop.f32.mrb[0].mxu0
      %728 = vdwg.mxu0
      %729 = vmatprep.subr.bf16.mxu0 0
      %730 = vmatpush1.bf16.msra.mxu0 %v599
      %731 = vmatprep.subr.bf16.mxu0 0
      %732 = vmatpush1.bf16.msra.mxu0 %v600
      %733 = vmatprep.subr.bf16.mxu0 0
      %734 = vmatpush1.bf16.msra.mxu0 %v601
      %735 = vmatprep.subr.bf16.mxu0 0
      %736 = vmatpush1.bf16.msra.mxu0 %v602
      %737 = vmatprep.subr.bf16.mxu0 0
      %738 = vmatpush1.bf16.msra.mxu0 %v603
      %739 = vmatprep.subr.bf16.mxu0 0
      %740 = vmatpush1.bf16.msra.mxu0 %v604
      %741 = vmatprep.subr.bf16.mxu0 0
      %742 = vmatpush1.bf16.msra.mxu0 %v605
      %743 = vmatprep.subr.bf16.mxu0 0
      %744 = vmatpush1.bf16.msra.mxu0 %v606
      %745 = vmatprep.subr.bf16.mxu0 0
      %746 = vmatpush1.bf16.msra.mxu0 0
      %747 = vmatprep.subr.bf16.mxu0 0
      %748 = vmatpush1.bf16.msra.mxu0 0
      %749 = vmatprep.subr.bf16.mxu0 0
      %750 = vmatpush1.bf16.msra.mxu0 0
      %751 = vmatprep.subr.bf16.mxu0 0
      %752 = vmatpush1.bf16.msra.mxu0 0
      %753 = vmatprep.subr.bf16.mxu0 0
      %754 = vmatpush1.bf16.msra.mxu0 0
      %755 = vmatprep.subr.bf16.mxu0 0
      %756 = vmatpush1.bf16.msra.mxu0 0
      %757 = vmatprep.subr.bf16.mxu0 0
      %758 = vmatpush1.bf16.msra.mxu0 0
      %759 = vmatprep.subr.bf16.mxu0 0
      %760 = vmatpush1.bf16.msra.mxu0 0
      %761 = vmatprep.mubr.bf16.mxu0 0
      %762 = vmatmul.mubr.bf16.gmra.mrb[0].mxu0 %v401
      %v763 = vpop.f32.mrb[0].mxu0
      %v764 = vadd.f32 %v723, %v763
      %v765 = vpop.f32.mrb[0].mxu0
      %v766 = vpop.f32.mrb[0].mxu0
      %v767 = vadd.f32 %v726, %v766
      %v768 = vpop.f32.mrb[0].mxu0
      %769 = vdwg.mxu0
      %v770 = vadd.f32 %v373, %v764
      %v771 = vadd.f32 %v374, %v767
      %772 = vst [vmem:[#allocation2] sm:$0xff] %v770
      %773 = vst [vmem:[#allocation2 + $0x8] sm:$0xff] %v771
      // Predicated region
      $region45: #{basic_block_forward.5} parent=39 // pred_check
        %p774 = pneg %p282
      $region46: #{basic_block_forward.5} parent=39 // pred_check_branch
        %776 = sbr.rel (%p774) target = $region48
      $region47: #{basic_block_forward.5} parent=39 // pred_region
        %v777 = vld [vmem:[#allocation2] sm:$0xff]
        %v778 = vld [vmem:[#allocation2 + $0x8] sm:$0xff]
        %v779 = vld [vmem:[%s2] sm:$0x1]
        %v781 = vlaneseq
        %v782 = vshrl.u32 %v781, 7
        %v783 = vsub.s32 0, %v782
        %v784 = vrot.slane %v779, %v783
        %v786 = vmul.f32 %v777, %v784
        %v787 = vmul.f32 %v778, %v784
        %v788 = vld [vmem:[%s3] sm:$0x1]
        %v790 = vlaneseq
        %v791 = vshrl.u32 %v790, 7
        %v792 = vsub.s32 0, %v791
        %v793 = vrot.slane %v788, %v792
        %v795 = vadd.f32 %v786, %v793
        %v796 = vadd.f32 %v787, %v793
        %v797 = vld [vmem:[%s273] sm:$0xf]
        %v798 = vld [vmem:[%s273 + $0x4] sm:$0xf]
        %v799 = vunpack.c.l.bf16 %v797
        %v800 = vunpack.c.l.bf16 %v798
        %v801 = vadd.f32 %v795, %v799
        %v802 = vadd.f32 %v796, %v800
        %v803 = vmax.f32 %v801, 0.0
        %v804 = vmax.f32 %v802, 0.0
        %v805 = vpack.c.bf16 %v804, %v803
        %v807 = vunpack.c.l.b16 %v805
        %v808 = vunpack.c.h.b16 %v805
        %v809 = vpack.c.b16 %v807, %v807
        %v810 = vpack.c.b16 %v808, %v808
        %813 = vst [vmem:[%s279] sm:$0xf] %v809
        %814 = vst [vmem:[%s279 + $0x4] sm:$0xf] %v810
      $region48: #{basic_block_forward.5} parent=39 // pred_fallthru
        _
      %s815 = smul.u32 2, %s20
      %p816 = scmp.lt.s32.totalorder %s815, 3
      %s817 = scalar_select %p816, %s815, 3
      %s818 = smul.addr %s817, 4
      %s819 = scalar_lea.vmem %s5, %s818
      // Predicated region
      $region49: #{basic_block_forward.5} parent=39 // pred_check
        %p820 = pneg %p163
      $region50: #{basic_block_forward.5} parent=39 // pred_check_branch
        %822 = sbr.rel (%p820) target = $region52
      $region51: #{basic_block_forward.5} parent=39 // pred_region
        %s823 = smul.u32 2, %s20
      $region52: #{basic_block_forward.5} parent=39 // pred_fallthru
        _
    $region40: #{basic_block_forward.5} parent=5 // pred_fallthru
      _
    %p824 = scmp.le.s32.totalorder 2, %s11
    // Predicated region
    $region53: #{basic_block_forward.5} parent=5 // pred_check
      %p825 = pneg %p824
    $region54: #{basic_block_forward.5} parent=5 // pred_check_branch
      %827 = sbr.rel (%p825) target = $region56
    $region55: #{basic_block_forward.5} parent=5 // pred_region
      %s828 = ssub.s32 %s11, 2
      // Predicated region
      $region57: #{basic_block_forward.5} parent=55 // pred_check
        %p829 = pneg %p169
      $region58: #{basic_block_forward.5} parent=55 // pred_check_branch
        %831 = sbr.rel (%p829) target = $region60
      $region59: #{basic_block_forward.5} parent=55 // pred_region
        %s832 = smul.u32 2, %s22
        %p833 = scmp.lt.s32.totalorder %s832, 3
        %s834 = scalar_select %p833, %s832, 3
        %s835 = smul.addr %s834, 4
        %s836 = scalar_lea.vmem %s5, %s835
      $region60: #{basic_block_forward.5} parent=55 // pred_fallthru
        _
    $region56: #{basic_block_forward.5} parent=5 // pred_fallthru
      _
  $region6: #{basic_block_forward.5} parent=0 // loop_footer
    %s15 = sadd.s32 1, %s11
  $region7: #{basic_block_forward.5} parent=0 // loop_footer_branch
    %10 = sbr.rel target = $region3
  $region8: #{basic_block_forward.5} parent=0 // loop_exit
    _

</llo_original>
